<compile_context>
chip_gen: v7x
topology: tpu7x:2x2x1
jax: 0.10.0
libtpu: 0.0.40
codegen_flags: <defaults>
</compile_context>

<pallas_src>
import functools

import jax
import jax.numpy as jnp
from jax.experimental import pallas as pl
from jax.experimental.pallas import tpu as pltpu

CPAD = 128  # lane-dense channel padding (vreg lane width)


# ------------------------------ fused TCN kernel ------------------------------
def _tcn_kernel(*refs, layers_meta, K, out_real):
    """Fused TCN forward.

    refs = (x, [per-layer: w1, b1, w2, b2, (wd, bd)?]..., wl, bl,
            out, buf0, buf1, slab)
      x    : (N, L, CPAD)            bf16   lane-padded NLC input
      w1/w2: (K*CPAD, CPAD)          bf16   im2col conv weights (tap-major rows)
      b1/b2: (1, CPAD)               f32
      wd   : (CPAD, CPAD)            bf16   1x1 downsample (iff cin != cout)
      bd   : (1, CPAD)               f32
      wl   : (CPAD, OPAD)            bf16   Linear head
      bl   : (1, OPAD)               f32
      out  : (N, OPAD)               f32    log-probs (padded lanes = -inf)
      buf0 : (N, L+PP, CPAD)         bf16   block I/O activations (left pad)
      buf1 : (N, L+PP, CPAD)         bf16   intra-block intermediate (left pad)
      slab : (N*L, K*CPAD)           bf16   im2col staging
    """
    it = iter(refs)
    x_ref = next(it)
    layer_refs = []
    for (_, has_ds) in layers_meta:
        w1 = next(it); b1 = next(it); w2 = next(it); b2 = next(it)
        wd = next(it) if has_ds else None
        bd = next(it) if has_ds else None
        layer_refs.append((w1, b1, w2, b2, wd, bd))
    wl_ref = next(it)
    bl_ref = next(it)
    o_ref = next(it)
    buf0 = next(it)
    buf1 = next(it)
    slab = next(it)

    N, L, C = x_ref.shape
    PP = buf0.shape[1] - L          # pad rows (>= max layer padding, %16 == 0)
    NL = N * L

    # Zero the causal-pad rows once; rows [PP, PP+L) are rewritten per layer.
    zpad = jnp.zeros((N, PP, C), jnp.bfloat16)
    buf0[:, 0:PP, :] = zpad
    buf1[:, 0:PP, :] = zpad
    buf0[:, PP:PP + L, :] = x_ref[...]          # aligned store (PP % 16 == 0)

    def causal_conv(src_buf, w_ref, b_ref, dilation):
        # im2col: K shifted slices -> one (NL, K*C) @ (K*C, C) bf16 MXU push.
        P = dilation * (K - 1)
        for j in range(K):
            off = PP - P + j * dilation         # tap look-back; j=K-1 aligned
            slab[:, j * C:(j + 1) * C] = (
                src_buf[:, off:off + L, :].reshape(NL, C))
        acc = jnp.dot(slab[...], w_ref[...],
                      preferred_element_type=jnp.float32)        # (NL, C) f32
        return acc + b_ref[...].astype(jnp.float32)

    for (w1, b1, w2, b2, wd, bd), (dil, has_ds) in zip(layer_refs, layers_meta):
        # conv1 + ReLU  (dropout1: eval mode -> identity)
        y1 = jnp.maximum(causal_conv(buf0, w1, b1, dil), 0.0)
        buf1[:, PP:PP + L, :] = y1.reshape(N, L, C).astype(jnp.bfloat16)
        # conv2 + ReLU  (dropout2: eval mode -> identity)
        y2 = jnp.maximum(causal_conv(buf1, w2, b2, dil), 0.0)
        # residual
        x_in = buf0[:, PP:PP + L, :].reshape(NL, C)              # bf16
        if has_ds:
            res = (jnp.dot(x_in, wd[...], preferred_element_type=jnp.float32)
                   + bd[...].astype(jnp.float32))
        else:
            res = x_in.astype(jnp.float32)
        out = jnp.maximum(y2 + res, 0.0)
        buf0[:, PP:PP + L, :] = out.reshape(N, L, C).astype(jnp.bfloat16)

    # Linear head on the last time step + masked log_softmax (lane-dense out).
    y_last = buf0[:, PP + L - 1:PP + L, :].reshape(N, C)         # (N, C) bf16
    logits = (jnp.dot(y_last, wl_ref[...], preferred_element_type=jnp.float32)
              + bl_ref[...].astype(jnp.float32))                 # (N, OPAD)
    OPAD = logits.shape[-1]
    lane = jax.lax.broadcasted_iota(jnp.int32, (N, OPAD), 1)
    logits = jnp.where(lane < out_real, logits, -jnp.inf)
    m = jnp.max(logits, axis=-1, keepdims=True)
    lse = m + jnp.log(jnp.sum(jnp.exp(logits - m), axis=-1, keepdims=True))
    o_ref[...] = (logits - lse).astype(o_ref.dtype)


# ----------------------------------- wrapper -----------------------------------
def tcn_forward(x_ncl, params):
    """x_ncl: (batch, num_features, seq_length) like the PyTorch module.
    Returns (batch, output_size) log-probabilities."""
    N, Cin, L = x_ncl.shape
    layers = params["layers"]
    K = layers[0]["kernel_size"]
    O = params["out_real"]
    OPAD = params["wl"].shape[-1]

    max_p = max(lp["dilation"] * (K - 1) for lp in layers)
    PP = -(-max_p // 16) * 16        # bf16 sublane-tile aligned pad rows

    # NCL -> NLC, bf16, zero-pad channels to CPAD lanes (tiny XLA prologue).
    x = jnp.transpose(x_ncl, (0, 2, 1)).astype(jnp.bfloat16)
    x = jnp.pad(x, ((0, 0), (0, 0), (0, CPAD - Cin)))

    in_specs = [pl.BlockSpec((N, L, CPAD), lambda i: (0, 0, 0))]
    args = [x]
    layers_meta = []
    for lp in layers:
        in_specs += [pl.BlockSpec((K * CPAD, CPAD), lambda i: (0, 0)),
                     pl.BlockSpec((1, CPAD), lambda i: (0, 0)),
                     pl.BlockSpec((K * CPAD, CPAD), lambda i: (0, 0)),
                     pl.BlockSpec((1, CPAD), lambda i: (0, 0))]
        args += [lp["w1"], lp["b1"], lp["w2"], lp["b2"]]
        has_ds = "wd" in lp
        if has_ds:
            in_specs += [pl.BlockSpec((CPAD, CPAD), lambda i: (0, 0)),
                         pl.BlockSpec((1, CPAD), lambda i: (0, 0))]
            args += [lp["wd"], lp["bd"]]
        layers_meta.append((lp["dilation"], has_ds))
    in_specs += [pl.BlockSpec((CPAD, OPAD), lambda i: (0, 0)),
                 pl.BlockSpec((1, OPAD), lambda i: (0, 0))]
    args += [params["wl"], params["bl"]]

    kernel = functools.partial(_tcn_kernel, layers_meta=tuple(layers_meta),
                               K=K, out_real=O)

    scratch_shapes = [pltpu.VMEM((N, L + PP, CPAD), jnp.bfloat16),
                      pltpu.VMEM((N, L + PP, CPAD), jnp.bfloat16),
                      pltpu.VMEM((N * L, K * CPAD), jnp.bfloat16)]

    # Explicit VMEM budget: in/out (x2 for double buffering) + scratch, x2 slack.
    in_bytes = sum(int(a.size) * a.dtype.itemsize for a in args)
    out_bytes = N * OPAD * 4
    scratch_bytes = 2 * (N * (L + PP) * CPAD * 2) + (N * L * K * CPAD * 2)
    vmem_limit = int(min(100 << 20,
                         max(16 << 20,
                             2 * (2 * in_bytes + 2 * out_bytes + scratch_bytes))))

    out_padded = pl.pallas_call(
        kernel,
        out_shape=jax.ShapeDtypeStruct((N, OPAD), jnp.float32),
        grid_spec=pltpu.PrefetchScalarGridSpec(
            num_scalar_prefetch=0,
            grid=(1,),
            in_specs=in_specs,
            out_specs=pl.BlockSpec((N, OPAD), lambda i: (0, 0)),
            scratch_shapes=scratch_shapes),
        compiler_params=pltpu.CompilerParams(
            dimension_semantics=("arbitrary",),
            vmem_limit_bytes=vmem_limit),
    )(*args)
    return out_padded[:, :O]


# ------------------------------ parameter setup --------------------------------
def init_tcn_params(key, input_size, output_size, num_channels, kernel_size):
    """Lane-padded (CPAD) parameters; conv weights stored bf16 in im2col layout
    (K*CPAD, CPAD) with tap-major rows.

    weight_norm(v) with PyTorch's default g = ||v|| is the identity at init,
    so effective initial conv weights are the N(0, 0.01) draws
    (TemporalBlock.init_weights).  Biases / Linear head use PyTorch-style
    uniform(+-1/sqrt(fan_in)) init (glue-level detail, not kernel semantics).
    """
    def unif(k, shape, fan_in):
        b = 1.0 / (fan_in ** 0.5)
        return jax.random.uniform(k, shape, jnp.float32, -b, b)

    layers = []
    for i, cout in enumerate(num_channels):
        key, k1, k2, k3, k4, k5, k6 = jax.random.split(key, 7)
        cin = input_size if i == 0 else num_channels[i - 1]

        w1 = jnp.zeros((kernel_size, CPAD, CPAD), jnp.float32)
        w1 = w1.at[:, :cin, :cout].set(
            0.01 * jax.random.normal(k1, (kernel_size, cin, cout), jnp.float32))
        b1 = jnp.zeros((1, CPAD), jnp.float32).at[:, :cout].set(
            unif(k2, (1, cout), cin * kernel_size))

        w2 = jnp.zeros((kernel_size, CPAD, CPAD), jnp.float32)
        w2 = w2.at[:, :cout, :cout].set(
            0.01 * jax.random.normal(k3, (kernel_size, cout, cout), jnp.float32))
        b2 = jnp.zeros((1, CPAD), jnp.float32).at[:, :cout].set(
            unif(k4, (1, cout), cout * kernel_size))

        layer = {"w1": w1.reshape(kernel_size * CPAD, CPAD).astype(jnp.bfloat16),
                 "b1": b1,
                 "w2": w2.reshape(kernel_size * CPAD, CPAD).astype(jnp.bfloat16),
                 "b2": b2,
                 "kernel_size": kernel_size, "dilation": 2 ** i,
                 "cin_real": cin, "cout_real": cout}
        if cin != cout:
            wd = jnp.zeros((CPAD, CPAD), jnp.float32)
            wd = wd.at[:cin, :cout].set(
                0.01 * jax.random.normal(k5, (cin, cout), jnp.float32))
            bd = jnp.zeros((1, CPAD), jnp.float32).at[:, :cout].set(
                unif(k6, (1, cout), cin))
            layer["wd"] = wd.astype(jnp.bfloat16)
            layer["bd"] = bd
        layers.append(layer)

    key, kw, kb = jax.random.split(key, 3)
    c_last = num_channels[-1]
    opad = -(-output_size // 128) * 128
    wl = jnp.zeros((CPAD, opad), jnp.float32)
    wl = wl.at[:c_last, :output_size].set(
        unif(kw, (c_last, output_size), c_last))
    bl = jnp.zeros((1, opad), jnp.float32).at[:, :output_size].set(
        unif(kb, (1, output_size), c_last))
    return {"layers": layers, "wl": wl.astype(jnp.bfloat16), "bl": bl,
            "out_real": output_size}


# ------------------------------ pure-JAX reference -----------------------------
def ref_tcn_forward(x_ncl, params):
    """Unpadded reference, mirroring the kernel's bf16 activation/weight casts."""
    x = jnp.transpose(x_ncl, (0, 2, 1)).astype(jnp.bfloat16)     # (N, L, Cin)
    N, L, _ = x.shape
    for lp in params["layers"]:
        K, D = lp["kernel_size"], lp["dilation"]
        P = D * (K - 1)
        cin, cout = lp["cin_real"], lp["cout_real"]
        w1 = lp["w1"].reshape(K, CPAD, CPAD)[:, :cin, :cout]     # bf16
        b1 = lp["b1"][:, :cout]
        w2 = lp["w2"].reshape(K, CPAD, CPAD)[:, :cout, :cout]
        b2 = lp["b2"][:, :cout]

        def causal_conv(inp, w, b, ci, co):
            inp_pad = jnp.concatenate(
                [jnp.zeros((N, P, ci), jnp.bfloat16), inp], axis=1)
            acc = jnp.zeros((N, L, co), jnp.float32)
            for j in range(K):
                tap = inp_pad[:, j * D:j * D + L, :]
                acc = acc + jnp.einsum("nlc,cd->nld", tap, w[j],
                                       preferred_element_type=jnp.float32)
            return acc + b

        y1 = jnp.maximum(causal_conv(x, w1, b1, cin, cout),
                         0.0).astype(jnp.bfloat16)
        y2 = jnp.maximum(causal_conv(y1, w2, b2, cout, cout), 0.0)
        if "wd" in lp:
            res = (jnp.einsum("nlc,cd->nld", x, lp["wd"][:cin, :cout],
                              preferred_element_type=jnp.float32)
                   + lp["bd"][:, :cout])
        else:
            res = x.astype(jnp.float32)
        x = jnp.maximum(y2 + res, 0.0).astype(jnp.bfloat16)

    c_last = params["layers"][-1]["cout_real"]
    O = params["out_real"]
    y_last = x[:, -1, :]                                         # bf16
    logits = (jnp.dot(y_last, params["wl"][:c_last, :O],
                      preferred_element_type=jnp.float32)
              + params["bl"][:, :O])
    return jax.nn.log_softmax(logits, axis=1)


if __name__ == "__main__":
    # TCN(input_size=4, output_size=10, num_channels=[8, 8], kernel_size=3,
    #     dropout=0.2) in eval mode; inputs (batch, num_features, seq_length).
    N, Cin, L = 2, 4, 16
    num_channels = [8, 8]
    kernel_size = 3
    output_size = 10

    key = jax.random.PRNGKey(0)
    kx, kp = jax.random.split(key)
    x_ncl = jax.random.normal(kx, (N, Cin, L), jnp.float32)

    params = init_tcn_params(kp, Cin, output_size, num_channels, kernel_size)

    out = jax.block_until_ready(tcn_forward(x_ncl, params))
    ref = jax.block_until_ready(ref_tcn_forward(x_ncl, params))

    assert out.shape == (N, output_size), out.shape
    assert bool(jnp.all(jnp.isfinite(out)))
    max_err = float(jnp.max(jnp.abs(out - ref)))
    # bf16 inter-layer activations in both kernel and reference; tolerance
    # covers f32 accumulation-order differences at bf16 rounding boundaries.
    assert max_err < 2e-3, f"mismatch vs reference: max abs err {max_err:.3e}"
    # log-probabilities must normalise
    assert jnp.allclose(jnp.sum(jnp.exp(out), axis=1), 1.0, atol=1e-3)

    print("KERNEL_OK")
</pallas_src>

<mosaic_0001>
module attributes {stable_mosaic.version = 11 : i64} {
  func.func @_tcn_kernel(%arg0: i32, %arg1: memref<2x16x128xbf16, #tpu.memory_space<vmem>>, %arg2: memref<384x128xbf16, #tpu.memory_space<vmem>>, %arg3: memref<1x128xf32, #tpu.memory_space<vmem>>, %arg4: memref<384x128xbf16, #tpu.memory_space<vmem>>, %arg5: memref<1x128xf32, #tpu.memory_space<vmem>>, %arg6: memref<128x128xbf16, #tpu.memory_space<vmem>>, %arg7: memref<1x128xf32, #tpu.memory_space<vmem>>, %arg8: memref<384x128xbf16, #tpu.memory_space<vmem>>, %arg9: memref<1x128xf32, #tpu.memory_space<vmem>>, %arg10: memref<384x128xbf16, #tpu.memory_space<vmem>>, %arg11: memref<1x128xf32, #tpu.memory_space<vmem>>, %arg12: memref<128x128xbf16, #tpu.memory_space<vmem>>, %arg13: memref<1x128xf32, #tpu.memory_space<vmem>>, %arg14: memref<2x128xf32, #tpu.memory_space<vmem>>, %arg15: memref<2x32x128xbf16, #tpu.memory_space<vmem>>, %arg16: memref<2x32x128xbf16, #tpu.memory_space<vmem>>, %arg17: memref<32x384xbf16, #tpu.memory_space<vmem>>) attributes {dimension_semantics = [#tpu.dimension_semantics<arbitrary>], iteration_bounds = array<i64: 1>, scalar_prefetch = 0 : i64, scratch_operands = 3 : i64, tpu.core_type = #tpu.core_type<tc>, window_params = [{pipeline_mode = #tpu.pipeline_mode<synchronous>, transform_indices = @transform_0, window_bounds = array<i64: 2, 16, 128>}, {pipeline_mode = #tpu.pipeline_mode<synchronous>, transform_indices = @transform_1, window_bounds = array<i64: 384, 128>}, {pipeline_mode = #tpu.pipeline_mode<synchronous>, transform_indices = @transform_2, window_bounds = array<i64: 1, 128>}, {pipeline_mode = #tpu.pipeline_mode<synchronous>, transform_indices = @transform_3, window_bounds = array<i64: 384, 128>}, {pipeline_mode = #tpu.pipeline_mode<synchronous>, transform_indices = @transform_4, window_bounds = array<i64: 1, 128>}, {pipeline_mode = #tpu.pipeline_mode<synchronous>, transform_indices = @transform_5, window_bounds = array<i64: 128, 128>}, {pipeline_mode = #tpu.pipeline_mode<synchronous>, transform_indices = @transform_6, window_bounds = array<i64: 1, 128>}, {pipeline_mode = #tpu.pipeline_mode<synchronous>, transform_indices = @transform_7, window_bounds = array<i64: 384, 128>}, {pipeline_mode = #tpu.pipeline_mode<synchronous>, transform_indices = @transform_8, window_bounds = array<i64: 1, 128>}, {pipeline_mode = #tpu.pipeline_mode<synchronous>, transform_indices = @transform_9, window_bounds = array<i64: 384, 128>}, {pipeline_mode = #tpu.pipeline_mode<synchronous>, transform_indices = @transform_10, window_bounds = array<i64: 1, 128>}, {pipeline_mode = #tpu.pipeline_mode<synchronous>, transform_indices = @transform_11, window_bounds = array<i64: 128, 128>}, {pipeline_mode = #tpu.pipeline_mode<synchronous>, transform_indices = @transform_12, window_bounds = array<i64: 1, 128>}, {pipeline_mode = #tpu.pipeline_mode<synchronous>, transform_indices = @transform_13, window_bounds = array<i64: 2, 128>}]} {
    %cst = arith.constant 0.000000e+00 : bf16
    %0 = vector.broadcast %cst : bf16 to vector<2x16x128xbf16>
    %c0 = arith.constant 0 : index
    %c0_0 = arith.constant 0 : index
    %c0_1 = arith.constant 0 : index
    %1 = vector.load %arg15[%c0, %c0_0, %c0_1] : memref<2x32x128xbf16, #tpu.memory_space<vmem>>, vector<2x16x128xbf16>
    tpu.vector_store %arg15[%c0, %c0_0, %c0_1], %0 {strides = array<i32>} : memref<2x32x128xbf16, #tpu.memory_space<vmem>>, vector<2x16x128xbf16>,
    %c0_2 = arith.constant 0 : index
    %c0_3 = arith.constant 0 : index
    %c0_4 = arith.constant 0 : index
    %2 = vector.load %arg16[%c0_2, %c0_3, %c0_4] : memref<2x32x128xbf16, #tpu.memory_space<vmem>>, vector<2x16x128xbf16>
    tpu.vector_store %arg16[%c0_2, %c0_3, %c0_4], %0 {strides = array<i32>} : memref<2x32x128xbf16, #tpu.memory_space<vmem>>, vector<2x16x128xbf16>,
    %c0_5 = arith.constant 0 : index
    %c0_6 = arith.constant 0 : index
    %c0_7 = arith.constant 0 : index
    %3 = vector.load %arg1[%c0_5, %c0_6, %c0_7] : memref<2x16x128xbf16, #tpu.memory_space<vmem>>, vector<2x16x128xbf16>
    %c0_8 = arith.constant 0 : index
    %c16 = arith.constant 16 : index
    %c0_9 = arith.constant 0 : index
    %4 = vector.load %arg15[%c0_8, %c16, %c0_9] : memref<2x32x128xbf16, #tpu.memory_space<vmem>>, vector<2x16x128xbf16>
    tpu.vector_store %arg15[%c0_8, %c16, %c0_9], %3 {strides = array<i32>} : memref<2x32x128xbf16, #tpu.memory_space<vmem>>, vector<2x16x128xbf16>,
    %c0_10 = arith.constant 0 : index
    %c14 = arith.constant 14 : index
    %c0_11 = arith.constant 0 : index
    %5 = vector.load %arg15[%c0_10, %c14, %c0_11] : memref<2x32x128xbf16, #tpu.memory_space<vmem>>, vector<2x16x128xbf16>
    %6 = vector.shape_cast %5 : vector<2x16x128xbf16> to vector<32x128xbf16>
    %c0_12 = arith.constant 0 : index
    %c0_13 = arith.constant 0 : index
    %7 = vector.load %arg17[%c0_12, %c0_13] : memref<32x384xbf16, #tpu.memory_space<vmem>>, vector<32x128xbf16>
    tpu.vector_store %arg17[%c0_12, %c0_13], %6 {strides = array<i32>} : memref<32x384xbf16, #tpu.memory_space<vmem>>, vector<32x128xbf16>,
    %c0_14 = arith.constant 0 : index
    %c15 = arith.constant 15 : index
    %c0_15 = arith.constant 0 : index
    %8 = vector.load %arg15[%c0_14, %c15, %c0_15] : memref<2x32x128xbf16, #tpu.memory_space<vmem>>, vector<2x16x128xbf16>
    %9 = vector.shape_cast %8 : vector<2x16x128xbf16> to vector<32x128xbf16>
    %c0_16 = arith.constant 0 : index
    %c128 = arith.constant 128 : index
    %10 = vector.load %arg17[%c0_16, %c128] : memref<32x384xbf16, #tpu.memory_space<vmem>>, vector<32x128xbf16>
    tpu.vector_store %arg17[%c0_16, %c128], %9 {strides = array<i32>} : memref<32x384xbf16, #tpu.memory_space<vmem>>, vector<32x128xbf16>,
    %c0_17 = arith.constant 0 : index
    %c16_18 = arith.constant 16 : index
    %c0_19 = arith.constant 0 : index
    %11 = vector.load %arg15[%c0_17, %c16_18, %c0_19] : memref<2x32x128xbf16, #tpu.memory_space<vmem>>, vector<2x16x128xbf16>
    %12 = vector.shape_cast %11 : vector<2x16x128xbf16> to vector<32x128xbf16>
    %c0_20 = arith.constant 0 : index
    %c256 = arith.constant 256 : index
    %13 = vector.load %arg17[%c0_20, %c256] : memref<32x384xbf16, #tpu.memory_space<vmem>>, vector<32x128xbf16>
    tpu.vector_store %arg17[%c0_20, %c256], %12 {strides = array<i32>} : memref<32x384xbf16, #tpu.memory_space<vmem>>, vector<32x128xbf16>,
    %c0_21 = arith.constant 0 : index
    %c0_22 = arith.constant 0 : index
    %14 = vector.load %arg17[%c0_21, %c0_22] : memref<32x384xbf16, #tpu.memory_space<vmem>>, vector<32x384xbf16>
    %c0_23 = arith.constant 0 : index
    %c0_24 = arith.constant 0 : index
    %15 = vector.load %arg2[%c0_23, %c0_24] : memref<384x128xbf16, #tpu.memory_space<vmem>>, vector<384x128xbf16>
    %cst_25 = arith.constant dense<0.000000e+00> : vector<32x128xf32>
    %16 = tpu.matmul %14, %15, %cst_25 {dimension_numbers = #tpu.dot_dimension_numbers<[1], [0], [0], [1], [0, 0, 1, 1], [], []>} : vector<32x384xbf16>, vector<384x128xbf16>, vector<32x128xf32> -> vector<32x128xf32>
    %c0_26 = arith.constant 0 : index
    %c0_27 = arith.constant 0 : index
    %17 = vector.load %arg3[%c0_26, %c0_27] : memref<1x128xf32, #tpu.memory_space<vmem>>, vector<1x128xf32>
    %18 = vector.broadcast %17 : vector<1x128xf32> to vector<32x128xf32>
    %19 = arith.addf %16, %18 : vector<32x128xf32>
    %cst_28 = arith.constant 0.000000e+00 : f32
    %20 = vector.broadcast %cst_28 : f32 to vector<32x128xf32>
    %21 = arith.maximumf %19, %20 : vector<32x128xf32>
    %22 = vector.shape_cast %21 : vector<32x128xf32> to vector<2x16x128xf32>
    %23 = arith.truncf %22 : vector<2x16x128xf32> to vector<2x16x128xbf16>
    %c0_29 = arith.constant 0 : index
    %c16_30 = arith.constant 16 : index
    %c0_31 = arith.constant 0 : index
    %24 = vector.load %arg16[%c0_29, %c16_30, %c0_31] : memref<2x32x128xbf16, #tpu.memory_space<vmem>>, vector<2x16x128xbf16>
    tpu.vector_store %arg16[%c0_29, %c16_30, %c0_31], %23 {strides = array<i32>} : memref<2x32x128xbf16, #tpu.memory_space<vmem>>, vector<2x16x128xbf16>,
    %c0_32 = arith.constant 0 : index
    %c14_33 = arith.constant 14 : index
    %c0_34 = arith.constant 0 : index
    %25 = vector.load %arg16[%c0_32, %c14_33, %c0_34] : memref<2x32x128xbf16, #tpu.memory_space<vmem>>, vector<2x16x128xbf16>
    %26 = vector.shape_cast %25 : vector<2x16x128xbf16> to vector<32x128xbf16>
    %c0_35 = arith.constant 0 : index
    %c0_36 = arith.constant 0 : index
    %27 = vector.load %arg17[%c0_35, %c0_36] : memref<32x384xbf16, #tpu.memory_space<vmem>>, vector<32x128xbf16>
    tpu.vector_store %arg17[%c0_35, %c0_36], %26 {strides = array<i32>} : memref<32x384xbf16, #tpu.memory_space<vmem>>, vector<32x128xbf16>,
    %c0_37 = arith.constant 0 : index
    %c15_38 = arith.constant 15 : index
    %c0_39 = arith.constant 0 : index
    %28 = vector.load %arg16[%c0_37, %c15_38, %c0_39] : memref<2x32x128xbf16, #tpu.memory_space<vmem>>, vector<2x16x128xbf16>
    %29 = vector.shape_cast %28 : vector<2x16x128xbf16> to vector<32x128xbf16>
    %c0_40 = arith.constant 0 : index
    %c128_41 = arith.constant 128 : index
    %30 = vector.load %arg17[%c0_40, %c128_41] : memref<32x384xbf16, #tpu.memory_space<vmem>>, vector<32x128xbf16>
    tpu.vector_store %arg17[%c0_40, %c128_41], %29 {strides = array<i32>} : memref<32x384xbf16, #tpu.memory_space<vmem>>, vector<32x128xbf16>,
    %c0_42 = arith.constant 0 : index
    %c16_43 = arith.constant 16 : index
    %c0_44 = arith.constant 0 : index
    %31 = vector.load %arg16[%c0_42, %c16_43, %c0_44] : memref<2x32x128xbf16, #tpu.memory_space<vmem>>, vector<2x16x128xbf16>
    %32 = vector.shape_cast %31 : vector<2x16x128xbf16> to vector<32x128xbf16>
    %c0_45 = arith.constant 0 : index
    %c256_46 = arith.constant 256 : index
    %33 = vector.load %arg17[%c0_45, %c256_46] : memref<32x384xbf16, #tpu.memory_space<vmem>>, vector<32x128xbf16>
    tpu.vector_store %arg17[%c0_45, %c256_46], %32 {strides = array<i32>} : memref<32x384xbf16, #tpu.memory_space<vmem>>, vector<32x128xbf16>,
    %c0_47 = arith.constant 0 : index
    %c0_48 = arith.constant 0 : index
    %34 = vector.load %arg17[%c0_47, %c0_48] : memref<32x384xbf16, #tpu.memory_space<vmem>>, vector<32x384xbf16>
    %c0_49 = arith.constant 0 : index
    %c0_50 = arith.constant 0 : index
    %35 = vector.load %arg4[%c0_49, %c0_50] : memref<384x128xbf16, #tpu.memory_space<vmem>>, vector<384x128xbf16>
    %cst_51 = arith.constant dense<0.000000e+00> : vector<32x128xf32>
    %36 = tpu.matmul %34, %35, %cst_51 {dimension_numbers = #tpu.dot_dimension_numbers<[1], [0], [0], [1], [0, 0, 1, 1], [], []>} : vector<32x384xbf16>, vector<384x128xbf16>, vector<32x128xf32> -> vector<32x128xf32>
    %c0_52 = arith.constant 0 : index
    %c0_53 = arith.constant 0 : index
    %37 = vector.load %arg5[%c0_52, %c0_53] : memref<1x128xf32, #tpu.memory_space<vmem>>, vector<1x128xf32>
    %38 = vector.broadcast %37 : vector<1x128xf32> to vector<32x128xf32>
    %39 = arith.addf %36, %38 : vector<32x128xf32>
    %cst_54 = arith.constant 0.000000e+00 : f32
    %40 = vector.broadcast %cst_54 : f32 to vector<32x128xf32>
    %41 = arith.maximumf %39, %40 : vector<32x128xf32>
    %c0_55 = arith.constant 0 : index
    %c16_56 = arith.constant 16 : index
    %c0_57 = arith.constant 0 : index
    %42 = vector.load %arg15[%c0_55, %c16_56, %c0_57] : memref<2x32x128xbf16, #tpu.memory_space<vmem>>, vector<2x16x128xbf16>
    %43 = vector.shape_cast %42 : vector<2x16x128xbf16> to vector<32x128xbf16>
    %c0_58 = arith.constant 0 : index
    %c0_59 = arith.constant 0 : index
    %44 = vector.load %arg6[%c0_58, %c0_59] : memref<128x128xbf16, #tpu.memory_space<vmem>>, vector<128x128xbf16>
    %cst_60 = arith.constant dense<0.000000e+00> : vector<32x128xf32>
    %45 = tpu.matmul %43, %44, %cst_60 {dimension_numbers = #tpu.dot_dimension_numbers<[1], [0], [0], [1], [0, 0, 1, 1], [], []>} : vector<32x128xbf16>, vector<128x128xbf16>, vector<32x128xf32> -> vector<32x128xf32>
    %c0_61 = arith.constant 0 : index
    %c0_62 = arith.constant 0 : index
    %46 = vector.load %arg7[%c0_61, %c0_62] : memref<1x128xf32, #tpu.memory_space<vmem>>, vector<1x128xf32>
    %47 = vector.broadcast %46 : vector<1x128xf32> to vector<32x128xf32>
    %48 = arith.addf %45, %47 : vector<32x128xf32>
    %49 = arith.addf %41, %48 : vector<32x128xf32>
    %cst_63 = arith.constant 0.000000e+00 : f32
    %50 = vector.broadcast %cst_63 : f32 to vector<32x128xf32>
    %51 = arith.maximumf %49, %50 : vector<32x128xf32>
    %52 = vector.shape_cast %51 : vector<32x128xf32> to vector<2x16x128xf32>
    %53 = arith.truncf %52 : vector<2x16x128xf32> to vector<2x16x128xbf16>
    %c0_64 = arith.constant 0 : index
    %c16_65 = arith.constant 16 : index
    %c0_66 = arith.constant 0 : index
    %54 = vector.load %arg15[%c0_64, %c16_65, %c0_66] : memref<2x32x128xbf16, #tpu.memory_space<vmem>>, vector<2x16x128xbf16>
    tpu.vector_store %arg15[%c0_64, %c16_65, %c0_66], %53 {strides = array<i32>} : memref<2x32x128xbf16, #tpu.memory_space<vmem>>, vector<2x16x128xbf16>,
    %c0_67 = arith.constant 0 : index
    %c12 = arith.constant 12 : index
    %c0_68 = arith.constant 0 : index
    %55 = vector.load %arg15[%c0_67, %c12, %c0_68] : memref<2x32x128xbf16, #tpu.memory_space<vmem>>, vector<2x16x128xbf16>
    %56 = vector.shape_cast %55 : vector<2x16x128xbf16> to vector<32x128xbf16>
    %c0_69 = arith.constant 0 : index
    %c0_70 = arith.constant 0 : index
    %57 = vector.load %arg17[%c0_69, %c0_70] : memref<32x384xbf16, #tpu.memory_space<vmem>>, vector<32x128xbf16>
    tpu.vector_store %arg17[%c0_69, %c0_70], %56 {strides = array<i32>} : memref<32x384xbf16, #tpu.memory_space<vmem>>, vector<32x128xbf16>,
    %c0_71 = arith.constant 0 : index
    %c14_72 = arith.constant 14 : index
    %c0_73 = arith.constant 0 : index
    %58 = vector.load %arg15[%c0_71, %c14_72, %c0_73] : memref<2x32x128xbf16, #tpu.memory_space<vmem>>, vector<2x16x128xbf16>
    %59 = vector.shape_cast %58 : vector<2x16x128xbf16> to vector<32x128xbf16>
    %c0_74 = arith.constant 0 : index
    %c128_75 = arith.constant 128 : index
    %60 = vector.load %arg17[%c0_74, %c128_75] : memref<32x384xbf16, #tpu.memory_space<vmem>>, vector<32x128xbf16>
    tpu.vector_store %arg17[%c0_74, %c128_75], %59 {strides = array<i32>} : memref<32x384xbf16, #tpu.memory_space<vmem>>, vector<32x128xbf16>,
    %c0_76 = arith.constant 0 : index
    %c16_77 = arith.constant 16 : index
    %c0_78 = arith.constant 0 : index
    %61 = vector.load %arg15[%c0_76, %c16_77, %c0_78] : memref<2x32x128xbf16, #tpu.memory_space<vmem>>, vector<2x16x128xbf16>
    %62 = vector.shape_cast %61 : vector<2x16x128xbf16> to vector<32x128xbf16>
    %c0_79 = arith.constant 0 : index
    %c256_80 = arith.constant 256 : index
    %63 = vector.load %arg17[%c0_79, %c256_80] : memref<32x384xbf16, #tpu.memory_space<vmem>>, vector<32x128xbf16>
    tpu.vector_store %arg17[%c0_79, %c256_80], %62 {strides = array<i32>} : memref<32x384xbf16, #tpu.memory_space<vmem>>, vector<32x128xbf16>,
    %c0_81 = arith.constant 0 : index
    %c0_82 = arith.constant 0 : index
    %64 = vector.load %arg17[%c0_81, %c0_82] : memref<32x384xbf16, #tpu.memory_space<vmem>>, vector<32x384xbf16>
    %c0_83 = arith.constant 0 : index
    %c0_84 = arith.constant 0 : index
    %65 = vector.load %arg8[%c0_83, %c0_84] : memref<384x128xbf16, #tpu.memory_space<vmem>>, vector<384x128xbf16>
    %cst_85 = arith.constant dense<0.000000e+00> : vector<32x128xf32>
    %66 = tpu.matmul %64, %65, %cst_85 {dimension_numbers = #tpu.dot_dimension_numbers<[1], [0], [0], [1], [0, 0, 1, 1], [], []>} : vector<32x384xbf16>, vector<384x128xbf16>, vector<32x128xf32> -> vector<32x128xf32>
    %c0_86 = arith.constant 0 : index
    %c0_87 = arith.constant 0 : index
    %67 = vector.load %arg9[%c0_86, %c0_87] : memref<1x128xf32, #tpu.memory_space<vmem>>, vector<1x128xf32>
    %68 = vector.broadcast %67 : vector<1x128xf32> to vector<32x128xf32>
    %69 = arith.addf %66, %68 : vector<32x128xf32>
    %cst_88 = arith.constant 0.000000e+00 : f32
    %70 = vector.broadcast %cst_88 : f32 to vector<32x128xf32>
    %71 = arith.maximumf %69, %70 : vector<32x128xf32>
    %72 = vector.shape_cast %71 : vector<32x128xf32> to vector<2x16x128xf32>
    %73 = arith.truncf %72 : vector<2x16x128xf32> to vector<2x16x128xbf16>
    %c0_89 = arith.constant 0 : index
    %c16_90 = arith.constant 16 : index
    %c0_91 = arith.constant 0 : index
    %74 = vector.load %arg16[%c0_89, %c16_90, %c0_91] : memref<2x32x128xbf16, #tpu.memory_space<vmem>>, vector<2x16x128xbf16>
    tpu.vector_store %arg16[%c0_89, %c16_90, %c0_91], %73 {strides = array<i32>} : memref<2x32x128xbf16, #tpu.memory_space<vmem>>, vector<2x16x128xbf16>,
    %c0_92 = arith.constant 0 : index
    %c12_93 = arith.constant 12 : index
    %c0_94 = arith.constant 0 : index
    %75 = vector.load %arg16[%c0_92, %c12_93, %c0_94] : memref<2x32x128xbf16, #tpu.memory_space<vmem>>, vector<2x16x128xbf16>
    %76 = vector.shape_cast %75 : vector<2x16x128xbf16> to vector<32x128xbf16>
    %c0_95 = arith.constant 0 : index
    %c0_96 = arith.constant 0 : index
    %77 = vector.load %arg17[%c0_95, %c0_96] : memref<32x384xbf16, #tpu.memory_space<vmem>>, vector<32x128xbf16>
    tpu.vector_store %arg17[%c0_95, %c0_96], %76 {strides = array<i32>} : memref<32x384xbf16, #tpu.memory_space<vmem>>, vector<32x128xbf16>,
    %c0_97 = arith.constant 0 : index
    %c14_98 = arith.constant 14 : index
    %c0_99 = arith.constant 0 : index
    %78 = vector.load %arg16[%c0_97, %c14_98, %c0_99] : memref<2x32x128xbf16, #tpu.memory_space<vmem>>, vector<2x16x128xbf16>
    %79 = vector.shape_cast %78 : vector<2x16x128xbf16> to vector<32x128xbf16>
    %c0_100 = arith.constant 0 : index
    %c128_101 = arith.constant 128 : index
    %80 = vector.load %arg17[%c0_100, %c128_101] : memref<32x384xbf16, #tpu.memory_space<vmem>>, vector<32x128xbf16>
    tpu.vector_store %arg17[%c0_100, %c128_101], %79 {strides = array<i32>} : memref<32x384xbf16, #tpu.memory_space<vmem>>, vector<32x128xbf16>,
    %c0_102 = arith.constant 0 : index
    %c16_103 = arith.constant 16 : index
    %c0_104 = arith.constant 0 : index
    %81 = vector.load %arg16[%c0_102, %c16_103, %c0_104] : memref<2x32x128xbf16, #tpu.memory_space<vmem>>, vector<2x16x128xbf16>
    %82 = vector.shape_cast %81 : vector<2x16x128xbf16> to vector<32x128xbf16>
    %c0_105 = arith.constant 0 : index
    %c256_106 = arith.constant 256 : index
    %83 = vector.load %arg17[%c0_105, %c256_106] : memref<32x384xbf16, #tpu.memory_space<vmem>>, vector<32x128xbf16>
    tpu.vector_store %arg17[%c0_105, %c256_106], %82 {strides = array<i32>} : memref<32x384xbf16, #tpu.memory_space<vmem>>, vector<32x128xbf16>,
    %c0_107 = arith.constant 0 : index
    %c0_108 = arith.constant 0 : index
    %84 = vector.load %arg17[%c0_107, %c0_108] : memref<32x384xbf16, #tpu.memory_space<vmem>>, vector<32x384xbf16>
    %c0_109 = arith.constant 0 : index
    %c0_110 = arith.constant 0 : index
    %85 = vector.load %arg10[%c0_109, %c0_110] : memref<384x128xbf16, #tpu.memory_space<vmem>>, vector<384x128xbf16>
    %cst_111 = arith.constant dense<0.000000e+00> : vector<32x128xf32>
    %86 = tpu.matmul %84, %85, %cst_111 {dimension_numbers = #tpu.dot_dimension_numbers<[1], [0], [0], [1], [0, 0, 1, 1], [], []>} : vector<32x384xbf16>, vector<384x128xbf16>, vector<32x128xf32> -> vector<32x128xf32>
    %c0_112 = arith.constant 0 : index
    %c0_113 = arith.constant 0 : index
    %87 = vector.load %arg11[%c0_112, %c0_113] : memref<1x128xf32, #tpu.memory_space<vmem>>, vector<1x128xf32>
    %88 = vector.broadcast %87 : vector<1x128xf32> to vector<32x128xf32>
    %89 = arith.addf %86, %88 : vector<32x128xf32>
    %cst_114 = arith.constant 0.000000e+00 : f32
    %90 = vector.broadcast %cst_114 : f32 to vector<32x128xf32>
    %91 = arith.maximumf %89, %90 : vector<32x128xf32>
    %c0_115 = arith.constant 0 : index
    %c16_116 = arith.constant 16 : index
    %c0_117 = arith.constant 0 : index
    %92 = vector.load %arg15[%c0_115, %c16_116, %c0_117] : memref<2x32x128xbf16, #tpu.memory_space<vmem>>, vector<2x16x128xbf16>
    %93 = vector.shape_cast %92 : vector<2x16x128xbf16> to vector<32x128xbf16>
    %94 = arith.extf %93 : vector<32x128xbf16> to vector<32x128xf32>
    %95 = arith.addf %91, %94 : vector<32x128xf32>
    %cst_118 = arith.constant 0.000000e+00 : f32
    %96 = vector.broadcast %cst_118 : f32 to vector<32x128xf32>
    %97 = arith.maximumf %95, %96 : vector<32x128xf32>
    %98 = vector.shape_cast %97 : vector<32x128xf32> to vector<2x16x128xf32>
    %99 = arith.truncf %98 : vector<2x16x128xf32> to vector<2x16x128xbf16>
    %c0_119 = arith.constant 0 : index
    %c16_120 = arith.constant 16 : index
    %c0_121 = arith.constant 0 : index
    %100 = vector.load %arg15[%c0_119, %c16_120, %c0_121] : memref<2x32x128xbf16, #tpu.memory_space<vmem>>, vector<2x16x128xbf16>
    tpu.vector_store %arg15[%c0_119, %c16_120, %c0_121], %99 {strides = array<i32>} : memref<2x32x128xbf16, #tpu.memory_space<vmem>>, vector<2x16x128xbf16>,
    %c0_122 = arith.constant 0 : index
    %c31 = arith.constant 31 : index
    %c0_123 = arith.constant 0 : index
    %101 = vector.load %arg15[%c0_122, %c31, %c0_123] : memref<2x32x128xbf16, #tpu.memory_space<vmem>>, vector<2x1x128xbf16>
    %102 = vector.shape_cast %101 : vector<2x1x128xbf16> to vector<2x128xbf16>
    %c0_124 = arith.constant 0 : index
    %c0_125 = arith.constant 0 : index
    %103 = vector.load %arg12[%c0_124, %c0_125] : memref<128x128xbf16, #tpu.memory_space<vmem>>, vector<128x128xbf16>
    %cst_126 = arith.constant dense<0.000000e+00> : vector<2x128xf32>
    %104 = tpu.matmul %102, %103, %cst_126 {dimension_numbers = #tpu.dot_dimension_numbers<[1], [0], [0], [1], [0, 0, 1, 1], [], []>} : vector<2x128xbf16>, vector<128x128xbf16>, vector<2x128xf32> -> vector<2x128xf32>
    %c0_127 = arith.constant 0 : index
    %c0_128 = arith.constant 0 : index
    %105 = vector.load %arg13[%c0_127, %c0_128] : memref<1x128xf32, #tpu.memory_space<vmem>>, vector<1x128xf32>
    %106 = vector.broadcast %105 : vector<1x128xf32> to vector<2x128xf32>
    %107 = arith.addf %104, %106 : vector<2x128xf32>
    %108 = tpu.iota {dimensions = array<i32: 1>} : vector<2x128xi32>
    %c10_i32 = arith.constant 10 : i32
    %109 = vector.broadcast %c10_i32 : i32 to vector<2x128xi32>
    %110 = arith.cmpi slt, %108, %109 : vector<2x128xi32>
    %cst_129 = arith.constant 0xFF800000 : f32
    %111 = vector.broadcast %cst_129 : f32 to vector<2x128xf32>
    %112 = arith.select %110, %107, %111 : vector<2x128xi1>, vector<2x128xf32>
    %cst_130 = arith.constant dense<0xFF800000> : vector<2xf32>
    %113 = vector.multi_reduction <maximumf>, %112, %cst_130 [1] : vector<2x128xf32> to vector<2xf32>
    %114 = vector.shape_cast %113 : vector<2xf32> to vector<2x1xf32>
    %115 = vector.broadcast %114 : vector<2x1xf32> to vector<2x128xf32>
    %116 = arith.subf %112, %115 : vector<2x128xf32>
    %117 = math.exp %116 : vector<2x128xf32>
    %cst_131 = arith.constant dense<0.000000e+00> : vector<2xf32>
    %118 = vector.multi_reduction <add>, %117, %cst_131 [1] : vector<2x128xf32> to vector<2xf32>
    %119 = vector.shape_cast %118 : vector<2xf32> to vector<2x1xf32>
    %120 = math.log %119 : vector<2x1xf32>
    %121 = arith.addf %114, %120 : vector<2x1xf32>
    %122 = vector.broadcast %121 : vector<2x1xf32> to vector<2x128xf32>
    %123 = arith.subf %112, %122 : vector<2x128xf32>
    %c0_132 = arith.constant 0 : index
    %c0_133 = arith.constant 0 : index
    %124 = vector.load %arg14[%c0_132, %c0_133] : memref<2x128xf32, #tpu.memory_space<vmem>>, vector<2x128xf32>
    tpu.vector_store %arg14[%c0_132, %c0_133], %123 {strides = array<i32>} : memref<2x128xf32, #tpu.memory_space<vmem>>, vector<2x128xf32>,
    return
  }
  func.func @transform_0(%arg0: i32) -> (i32, i32, i32) {
    %c0_i32 = arith.constant 0 : i32
    %c0_i32_0 = arith.constant 0 : i32
    %c0_i32_1 = arith.constant 0 : i32
    %c0_i32_2 = arith.constant 0 : i32
    return %c0_i32, %c0_i32_0, %c0_i32_1 : i32, i32, i32
  }
  func.func @transform_1(%arg0: i32) -> (i32, i32) {
    %c0_i32 = arith.constant 0 : i32
    %c0_i32_0 = arith.constant 0 : i32
    %c0_i32_1 = arith.constant 0 : i32
    return %c0_i32, %c0_i32_0 : i32, i32
  }
  func.func @transform_2(%arg0: i32) -> (i32, i32) {
    %c0_i32 = arith.constant 0 : i32
    %c0_i32_0 = arith.constant 0 : i32
    %c0_i32_1 = arith.constant 0 : i32
    return %c0_i32, %c0_i32_0 : i32, i32
  }
  func.func @transform_3(%arg0: i32) -> (i32, i32) {
    %c0_i32 = arith.constant 0 : i32
    %c0_i32_0 = arith.constant 0 : i32
    %c0_i32_1 = arith.constant 0 : i32
    return %c0_i32, %c0_i32_0 : i32, i32
  }
  func.func @transform_4(%arg0: i32) -> (i32, i32) {
    %c0_i32 = arith.constant 0 : i32
    %c0_i32_0 = arith.constant 0 : i32
    %c0_i32_1 = arith.constant 0 : i32
    return %c0_i32, %c0_i32_0 : i32, i32
  }
  func.func @transform_5(%arg0: i32) -> (i32, i32) {
    %c0_i32 = arith.constant 0 : i32
    %c0_i32_0 = arith.constant 0 : i32
    %c0_i32_1 = arith.constant 0 : i32
    return %c0_i32, %c0_i32_0 : i32, i32
  }
  func.func @transform_6(%arg0: i32) -> (i32, i32) {
    %c0_i32 = arith.constant 0 : i32
    %c0_i32_0 = arith.constant 0 : i32
    %c0_i32_1 = arith.constant 0 : i32
    return %c0_i32, %c0_i32_0 : i32, i32
  }
  func.func @transform_7(%arg0: i32) -> (i32, i32) {
    %c0_i32 = arith.constant 0 : i32
    %c0_i32_0 = arith.constant 0 : i32
    %c0_i32_1 = arith.constant 0 : i32
    return %c0_i32, %c0_i32_0 : i32, i32
  }
  func.func @transform_8(%arg0: i32) -> (i32, i32) {
    %c0_i32 = arith.constant 0 : i32
    %c0_i32_0 = arith.constant 0 : i32
    %c0_i32_1 = arith.constant 0 : i32
    return %c0_i32, %c0_i32_0 : i32, i32
  }
  func.func @transform_9(%arg0: i32) -> (i32, i32) {
    %c0_i32 = arith.constant 0 : i32
    %c0_i32_0 = arith.constant 0 : i32
    %c0_i32_1 = arith.constant 0 : i32
    return %c0_i32, %c0_i32_0 : i32, i32
  }
  func.func @transform_10(%arg0: i32) -> (i32, i32) {
    %c0_i32 = arith.constant 0 : i32
    %c0_i32_0 = arith.constant 0 : i32
    %c0_i32_1 = arith.constant 0 : i32
    return %c0_i32, %c0_i32_0 : i32, i32
  }
  func.func @transform_11(%arg0: i32) -> (i32, i32) {
    %c0_i32 = arith.constant 0 : i32
    %c0_i32_0 = arith.constant 0 : i32
    %c0_i32_1 = arith.constant 0 : i32
    return %c0_i32, %c0_i32_0 : i32, i32
  }
  func.func @transform_12(%arg0: i32) -> (i32, i32) {
    %c0_i32 = arith.constant 0 : i32
    %c0_i32_0 = arith.constant 0 : i32
    %c0_i32_1 = arith.constant 0 : i32
    return %c0_i32, %c0_i32_0 : i32, i32
  }
  func.func @transform_13(%arg0: i32) -> (i32, i32) {
    %c0_i32 = arith.constant 0 : i32
    %c0_i32_0 = arith.constant 0 : i32
    %c0_i32_1 = arith.constant 0 : i32
    return %c0_i32, %c0_i32_0 : i32, i32
  }
}

</mosaic_0001>

<llo_original>
// kernel: tpu_custom_call.1
$region0: #{tpu_custom_call.1}
  #allocation0 [shape = 'u32[]', space=smem, size = 0x4, offset = 0x4, fixed_abs, tag = 'smem constant byte address 0x4 - core index']
  #allocation1 [shape = 'u32[144,128]{1,0:T(1,128)}', space=vmem, size = 0x12000, scoped, tag = 'internal scratch']
  #allocation2 [shape = 'bf16[2,32,128]{2,1,0:T(16,128)(2,1)}', space=vmem, size = 0x4000, scoped, tag = 'scratch operand']
  #allocation3 [shape = 'bf16[2,32,128]{2,1,0:T(16,128)(2,1)}', space=vmem, size = 0x4000, scoped, tag = 'scratch operand']
  #allocation4 [shape = 'bf16[32,384]{1,0:T(16,128)(2,1)}', space=vmem, size = 0x6000, scoped, tag = 'scratch operand']
  %s0 = inlined_call_operand.hbm [shape: bf16[2,16,128], index: 0, kind: input, shape index: {}]
  %s1 = inlined_call_operand.hbm [shape: bf16[384,128], index: 1, kind: input, shape index: {}]
  %s2 = inlined_call_operand.vmem [shape: f32[1,128], index: 2, kind: input, shape index: {}]
  %s3 = inlined_call_operand.hbm [shape: bf16[384,128], index: 3, kind: input, shape index: {}]
  %s4 = inlined_call_operand.vmem [shape: f32[1,128], index: 4, kind: input, shape index: {}]
  %s5 = inlined_call_operand.hbm [shape: bf16[128,128], index: 5, kind: input, shape index: {}]
  %s6 = inlined_call_operand.vmem [shape: f32[1,128], index: 6, kind: input, shape index: {}]
  %s7 = inlined_call_operand.hbm [shape: bf16[384,128], index: 7, kind: input, shape index: {}]
  %s8 = inlined_call_operand.vmem [shape: f32[1,128], index: 8, kind: input, shape index: {}]
  %s9 = inlined_call_operand.hbm [shape: bf16[384,128], index: 9, kind: input, shape index: {}]
  %s10 = inlined_call_operand.vmem [shape: f32[1,128], index: 10, kind: input, shape index: {}]
  %s11 = inlined_call_operand.hbm [shape: bf16[128,128], index: 11, kind: input, shape index: {}]
  %s12 = inlined_call_operand.vmem [shape: f32[1,128], index: 12, kind: input, shape index: {}]
  %s13 = inlined_call_operand.hbm [shape: f32[2,128], index: 13, kind: output, shape index: {}]
  %s14 = sld [smem:[#allocation0]]
  $region90: #{tpu_custom_call.1} parent=0
    _
  %s16 = ssub.s32 1, %s14
  %s17 = scalar_select 0, %s16, %s14
  $region1: #{tpu_custom_call.1} parent=0
    #allocation5 [shape = 'u8[8192]{0}', space=vmem, size = 0x2000, scoped, tag = 'input window, operand 0, single buffered']
    #allocation6 [shape = 's32[1]{0}', space=sflag, size = 0x4, scoped, tag = 'scoped memory for tpu_custom_call.1']
    #allocation7 [shape = 's32[1]{0}', space=sflag, size = 0x4, scoped, tag = 'scoped memory for tpu_custom_call.1']
    #allocation8 [shape = 'u8[98304]{0}', space=vmem, size = 0x18000, scoped, tag = 'input window, operand 1, single buffered']
    #allocation9 [shape = 's32[1]{0}', space=sflag, size = 0x4, scoped, tag = 'scoped memory for tpu_custom_call.1']
    #allocation10 [shape = 'u8[98304]{0}', space=vmem, size = 0x18000, scoped, tag = 'input window, operand 3, single buffered']
    #allocation11 [shape = 'u8[32768]{0}', space=vmem, size = 0x8000, scoped, tag = 'input window, operand 5, single buffered']
    #allocation12 [shape = 's32[1]{0}', space=sflag, size = 0x4, scoped, tag = 'scoped memory for tpu_custom_call.1']
    #allocation13 [shape = 'u8[98304]{0}', space=vmem, size = 0x18000, scoped, tag = 'input window, operand 7, single buffered']
    #allocation14 [shape = 'u8[98304]{0}', space=vmem, size = 0x18000, scoped, tag = 'input window, operand 9, single buffered']
    #allocation15 [shape = 's32[1]{0}', space=sflag, size = 0x4, scoped, tag = 'scoped memory for tpu_custom_call.1']
    #allocation16 [shape = 'u8[32768]{0}', space=vmem, size = 0x8000, scoped, tag = 'input window, operand 11, single buffered']
    #allocation17 [shape = 'u8[1024]{0}', space=vmem, size = 0x400, scoped, tag = 'output window, operand 0, single buffered']
    %18 = vsyncpa [#allocation6], 0
    %19 = vsyncpa [#allocation9], 0
    %20 = vsyncpa [#allocation12], 0
    %21 = vsyncpa [#allocation15], 0
    %22 = vsyncpa [#allocation7], 0
    // Predicated region
    $region2: #{tpu_custom_call.1} parent=1 // pred_check
      _
    $region3: #{tpu_custom_call.1} parent=1 // pred_check_branch
      %24 = sbr.rel (0) target = $region5
    $region4: #{tpu_custom_call.1} parent=1 // pred_region
      %s26 = ssub.s32 256, 256
      %27 = vsyncadd [#allocation6], %s26
      %s28 = sshll.u32 [#allocation5], 4
      %s29 = int_to_ptr.vmem [resolvable:$true] %s28
      %34 = dma.hbm_to_vmem [thread:$0]  %s0, 256, %s29, [#allocation6], 64, 64, 4
    $region5: #{tpu_custom_call.1} parent=1 // pred_fallthru
      _
    // Predicated region
    $region6: #{tpu_custom_call.1} parent=1 // pred_check
      _
    $region7: #{tpu_custom_call.1} parent=1 // pred_check_branch
      %36 = sbr.rel (0) target = $region9
    $region8: #{tpu_custom_call.1} parent=1 // pred_region
      %s38 = ssub.s32 3072, 3072
      %39 = vsyncadd [#allocation9], %s38
      %s40 = sshll.u32 [#allocation8], 4
      %s41 = int_to_ptr.vmem [resolvable:$true] %s40
      %46 = dma.hbm_to_vmem [thread:$0]  %s1, 3072, %s41, [#allocation9], 64, 64, 4
    $region9: #{tpu_custom_call.1} parent=1 // pred_fallthru
      _
    // Predicated region
    $region10: #{tpu_custom_call.1} parent=1 // pred_check
      _
    $region11: #{tpu_custom_call.1} parent=1 // pred_check_branch
      %48 = sbr.rel (0) target = $region13
    $region12: #{tpu_custom_call.1} parent=1 // pred_region
      _
    $region13: #{tpu_custom_call.1} parent=1 // pred_fallthru
      _
    // Predicated region
    $region14: #{tpu_custom_call.1} parent=1 // pred_check
      _
    $region15: #{tpu_custom_call.1} parent=1 // pred_check_branch
      %50 = sbr.rel (0) target = $region17
    $region16: #{tpu_custom_call.1} parent=1 // pred_region
      %s52 = ssub.s32 3072, 3072
      %53 = vsyncadd [#allocation9], %s52
      %s54 = sshll.u32 [#allocation10], 4
      %s55 = int_to_ptr.vmem [resolvable:$true] %s54
      %60 = dma.hbm_to_vmem [thread:$0]  %s3, 3072, %s55, [#allocation9], 64, 64, 4
    $region17: #{tpu_custom_call.1} parent=1 // pred_fallthru
      _
    // Predicated region
    $region18: #{tpu_custom_call.1} parent=1 // pred_check
      _
    $region19: #{tpu_custom_call.1} parent=1 // pred_check_branch
      %62 = sbr.rel (0) target = $region21
    $region20: #{tpu_custom_call.1} parent=1 // pred_region
      _
    $region21: #{tpu_custom_call.1} parent=1 // pred_fallthru
      _
    // Predicated region
    $region22: #{tpu_custom_call.1} parent=1 // pred_check
      _
    $region23: #{tpu_custom_call.1} parent=1 // pred_check_branch
      %64 = sbr.rel (0) target = $region25
    $region24: #{tpu_custom_call.1} parent=1 // pred_region
      %s66 = ssub.s32 1024, 1024
      %67 = vsyncadd [#allocation12], %s66
      %s68 = sshll.u32 [#allocation11], 4
      %s69 = int_to_ptr.vmem [resolvable:$true] %s68
      %74 = dma.hbm_to_vmem [thread:$0]  %s5, 1024, %s69, [#allocation12], 64, 64, 4
    $region25: #{tpu_custom_call.1} parent=1 // pred_fallthru
      _
    // Predicated region
    $region26: #{tpu_custom_call.1} parent=1 // pred_check
      _
    $region27: #{tpu_custom_call.1} parent=1 // pred_check_branch
      %76 = sbr.rel (0) target = $region29
    $region28: #{tpu_custom_call.1} parent=1 // pred_region
      _
    $region29: #{tpu_custom_call.1} parent=1 // pred_fallthru
      _
    // Predicated region
    $region30: #{tpu_custom_call.1} parent=1 // pred_check
      _
    $region31: #{tpu_custom_call.1} parent=1 // pred_check_branch
      %78 = sbr.rel (0) target = $region33
    $region32: #{tpu_custom_call.1} parent=1 // pred_region
      %s80 = ssub.s32 3072, 3072
      %81 = vsyncadd [#allocation12], %s80
      %s82 = sshll.u32 [#allocation13], 4
      %s83 = int_to_ptr.vmem [resolvable:$true] %s82
      %88 = dma.hbm_to_vmem [thread:$0]  %s7, 3072, %s83, [#allocation12], 64, 64, 4
    $region33: #{tpu_custom_call.1} parent=1 // pred_fallthru
      _
    // Predicated region
    $region34: #{tpu_custom_call.1} parent=1 // pred_check
      _
    $region35: #{tpu_custom_call.1} parent=1 // pred_check_branch
      %90 = sbr.rel (0) target = $region37
    $region36: #{tpu_custom_call.1} parent=1 // pred_region
      _
    $region37: #{tpu_custom_call.1} parent=1 // pred_fallthru
      _
    // Predicated region
    $region38: #{tpu_custom_call.1} parent=1 // pred_check
      _
    $region39: #{tpu_custom_call.1} parent=1 // pred_check_branch
      %92 = sbr.rel (0) target = $region41
    $region40: #{tpu_custom_call.1} parent=1 // pred_region
      %s94 = ssub.s32 3072, 3072
      %95 = vsyncadd [#allocation15], %s94
      %s96 = sshll.u32 [#allocation14], 4
      %s97 = int_to_ptr.vmem [resolvable:$true] %s96
      %102 = dma.hbm_to_vmem [thread:$0]  %s9, 3072, %s97, [#allocation15], 64, 64, 4
    $region41: #{tpu_custom_call.1} parent=1 // pred_fallthru
      _
    // Predicated region
    $region42: #{tpu_custom_call.1} parent=1 // pred_check
      _
    $region43: #{tpu_custom_call.1} parent=1 // pred_check_branch
      %104 = sbr.rel (0) target = $region45
    $region44: #{tpu_custom_call.1} parent=1 // pred_region
      _
    $region45: #{tpu_custom_call.1} parent=1 // pred_fallthru
      _
    // Predicated region
    $region46: #{tpu_custom_call.1} parent=1 // pred_check
      _
    $region47: #{tpu_custom_call.1} parent=1 // pred_check_branch
      %106 = sbr.rel (0) target = $region49
    $region48: #{tpu_custom_call.1} parent=1 // pred_region
      %s108 = ssub.s32 1024, 1024
      %109 = vsyncadd [#allocation15], %s108
      %s110 = sshll.u32 [#allocation16], 4
      %s111 = int_to_ptr.vmem [resolvable:$true] %s110
      %116 = dma.hbm_to_vmem [thread:$0]  %s11, 1024, %s111, [#allocation15], 64, 64, 4
    $region49: #{tpu_custom_call.1} parent=1 // pred_fallthru
      _
    // Predicated region
    $region50: #{tpu_custom_call.1} parent=1 // pred_check
      _
    $region51: #{tpu_custom_call.1} parent=1 // pred_check_branch
      %118 = sbr.rel (0) target = $region53
    $region52: #{tpu_custom_call.1} parent=1 // pred_region
      _
    $region53: #{tpu_custom_call.1} parent=1 // pred_fallthru
      _
    // Predicated region
    $region54: #{tpu_custom_call.1} parent=1 // pred_check
      _
    $region55: #{tpu_custom_call.1} parent=1 // pred_check_branch
      %120 = sbr.rel (0) target = $region57
    $region56: #{tpu_custom_call.1} parent=1 // pred_region
      %121 = dma.done [#allocation6], 256
    $region57: #{tpu_custom_call.1} parent=1 // pred_fallthru
      _
    // Predicated region
    $region58: #{tpu_custom_call.1} parent=1 // pred_check
      _
    $region59: #{tpu_custom_call.1} parent=1 // pred_check_branch
      %123 = sbr.rel (0) target = $region61
    $region60: #{tpu_custom_call.1} parent=1 // pred_region
      %124 = dma.done [#allocation9], 3072
    $region61: #{tpu_custom_call.1} parent=1 // pred_fallthru
      _
    // Predicated region
    $region62: #{tpu_custom_call.1} parent=1 // pred_check
      _
    $region63: #{tpu_custom_call.1} parent=1 // pred_check_branch
      %126 = sbr.rel (0) target = $region65
    $region64: #{tpu_custom_call.1} parent=1 // pred_region
      %127 = dma.done [#allocation9], 3072
    $region65: #{tpu_custom_call.1} parent=1 // pred_fallthru
      _
    // Predicated region
    $region66: #{tpu_custom_call.1} parent=1 // pred_check
      _
    $region67: #{tpu_custom_call.1} parent=1 // pred_check_branch
      %129 = sbr.rel (0) target = $region69
    $region68: #{tpu_custom_call.1} parent=1 // pred_region
      %130 = dma.done [#allocation12], 1024
    $region69: #{tpu_custom_call.1} parent=1 // pred_fallthru
      _
    // Predicated region
    $region70: #{tpu_custom_call.1} parent=1 // pred_check
      _
    $region71: #{tpu_custom_call.1} parent=1 // pred_check_branch
      %132 = sbr.rel (0) target = $region73
    $region72: #{tpu_custom_call.1} parent=1 // pred_region
      %133 = dma.done [#allocation12], 3072
    $region73: #{tpu_custom_call.1} parent=1 // pred_fallthru
      _
    // Predicated region
    $region74: #{tpu_custom_call.1} parent=1 // pred_check
      _
    $region75: #{tpu_custom_call.1} parent=1 // pred_check_branch
      %135 = sbr.rel (0) target = $region77
    $region76: #{tpu_custom_call.1} parent=1 // pred_region
      %136 = dma.done [#allocation15], 3072
    $region77: #{tpu_custom_call.1} parent=1 // pred_fallthru
      _
    // Predicated region
    $region78: #{tpu_custom_call.1} parent=1 // pred_check
      _
    $region79: #{tpu_custom_call.1} parent=1 // pred_check_branch
      %138 = sbr.rel (0) target = $region81
    $region80: #{tpu_custom_call.1} parent=1 // pred_region
      %139 = dma.done [#allocation15], 1024
    $region81: #{tpu_custom_call.1} parent=1 // pred_fallthru
      _
    %141 = vst [vmem:[#allocation2] sm:$0xff] 0
    %142 = vst [vmem:[#allocation2 + $0x10] sm:$0xff] 0
    %143 = vst [vmem:[#allocation3] sm:$0xff] 0
    %144 = vst [vmem:[#allocation3 + $0x10] sm:$0xff] 0
    %v145 = vld [vmem:[#allocation5] sm:$0xf]
    %v146 = vld [vmem:[#allocation5 + $0x4] sm:$0xf]
    %v147 = vld [vmem:[#allocation5 + $0x8] sm:$0xf]
    %v148 = vld [vmem:[#allocation5 + $0xc] sm:$0xf]
    %v153 = vunpack.c.l.b16 %v145
    %v154 = vunpack.c.l.b16 %v146
    %v155 = vunpack.c.l.b16 %v147
    %v156 = vunpack.c.l.b16 %v148
    %v157 = vpack.c.b16 %v154, %v153
    %v158 = vpack.c.b16 %v156, %v155
    %161 = vst [vmem:[#allocation2 + $0x8] sm:$0xff] %v157
    %162 = vst [vmem:[#allocation2 + $0x18] sm:$0xff] %v158
    %v163 = vld [vmem:[#allocation2] sm:$0x80]
    %v164 = vld [vmem:[#allocation2 + $0x8] sm:$0x7f]
    %v165 = vld [vmem:[#allocation2 + $0x10] sm:$0x80]
    %v166 = vld [vmem:[#allocation2 + $0x18] sm:$0x7f]
    %vm171 = vcmask 1040384
    %v172 = vrot.slane %v163, 7
    %v173 = vrot.slane %v164, 7
    %v174 = vsel %vm171, %v172, %v173
    %v175 = vrot.slane %v165, 7
    %v176 = vrot.slane %v166, 7
    %v177 = vsel %vm171, %v175, %v176
    %180 = vst [vmem:[#allocation4] sm:$0xff] %v174
    %181 = vst [vmem:[#allocation4 + $0x18] sm:$0xff] %v177
    %v182 = vld [vmem:[#allocation2] sm:$0x80]
    %v183 = vld [vmem:[#allocation2 + $0x8] sm:$0xff]
    %v184 = vld [vmem:[#allocation2 + $0x10] sm:$0x80]
    %v185 = vld [vmem:[#allocation2 + $0x18] sm:$0xff]
    %vm186 = vsmask.f32 256
    %v188 = vshrl.u32 %v182, 16
    %v190 = vrot.slane %v188, 7
    %v192 = vshrl.u32 %v183, 16
    %v194 = vrot.slane %v192, 7
    %v195 = vshll.u32 %v183, 16
    %v197 = vor.u32 %v194, %v195
    %v198 = vsel %vm186, %v190, %v197
    %v200 = vshrl.u32 %v184, 16
    %v202 = vrot.slane %v200, 7
    %v204 = vshrl.u32 %v185, 16
    %v206 = vrot.slane %v204, 7
    %v207 = vshll.u32 %v185, 16
    %v209 = vor.u32 %v206, %v207
    %v210 = vsel %vm186, %v202, %v209
    %213 = vst [vmem:[#allocation4 + $0x8] sm:$0xff] %v198
    %214 = vst [vmem:[#allocation4 + $0x20] sm:$0xff] %v210
    %v215 = vld [vmem:[#allocation2 + $0x8] sm:$0xff]
    %v216 = vld [vmem:[#allocation2 + $0x18] sm:$0xff]
    %217 = vst [vmem:[#allocation4 + $0x10] sm:$0xff] %v215
    %218 = vst [vmem:[#allocation4 + $0x28] sm:$0xff] %v216
    %v219 = vld [vmem:[#allocation4] sm:$0xff]
    %v220 = vld [vmem:[#allocation4 + $0x8] sm:$0xff]
    %v221 = vld [vmem:[#allocation4 + $0x10] sm:$0xff]
    %v222 = vld [vmem:[#allocation4 + $0x18] sm:$0xff]
    %v223 = vld [vmem:[#allocation4 + $0x20] sm:$0xff]
    %v224 = vld [vmem:[#allocation4 + $0x28] sm:$0xff]
    %v225 = vld [vmem:[#allocation8] sm:$0xf]
    %v226 = vld [vmem:[#allocation8 + $0x4] sm:$0xf]
    %v227 = vld [vmem:[#allocation8 + $0x8] sm:$0xf]
    %v228 = vld [vmem:[#allocation8 + $0xc] sm:$0xf]
    %v229 = vld [vmem:[#allocation8 + $0x10] sm:$0xf]
    %v230 = vld [vmem:[#allocation8 + $0x14] sm:$0xf]
    %v231 = vld [vmem:[#allocation8 + $0x18] sm:$0xf]
    %v232 = vld [vmem:[#allocation8 + $0x1c] sm:$0xf]
    %v233 = vld [vmem:[#allocation8 + $0x20] sm:$0xf]
    %v234 = vld [vmem:[#allocation8 + $0x24] sm:$0xf]
    %v235 = vld [vmem:[#allocation8 + $0x28] sm:$0xf]
    %v236 = vld [vmem:[#allocation8 + $0x2c] sm:$0xf]
    %v237 = vld [vmem:[#allocation8 + $0x30] sm:$0xf]
    %v238 = vld [vmem:[#allocation8 + $0x34] sm:$0xf]
    %v239 = vld [vmem:[#allocation8 + $0x38] sm:$0xf]
    %v240 = vld [vmem:[#allocation8 + $0x3c] sm:$0xf]
    %v241 = vld [vmem:[#allocation8 + $0x40] sm:$0xf]
    %v242 = vld [vmem:[#allocation8 + $0x44] sm:$0xf]
    %v243 = vld [vmem:[#allocation8 + $0x48] sm:$0xf]
    %v244 = vld [vmem:[#allocation8 + $0x4c] sm:$0xf]
    %v245 = vld [vmem:[#allocation8 + $0x50] sm:$0xf]
    %v246 = vld [vmem:[#allocation8 + $0x54] sm:$0xf]
    %v247 = vld [vmem:[#allocation8 + $0x58] sm:$0xf]
    %v248 = vld [vmem:[#allocation8 + $0x5c] sm:$0xf]
    %v249 = vld [vmem:[#allocation8 + $0x60] sm:$0xf]
    %v250 = vld [vmem:[#allocation8 + $0x64] sm:$0xf]
    %v251 = vld [vmem:[#allocation8 + $0x68] sm:$0xf]
    %v252 = vld [vmem:[#allocation8 + $0x6c] sm:$0xf]
    %v253 = vld [vmem:[#allocation8 + $0x70] sm:$0xf]
    %v254 = vld [vmem:[#allocation8 + $0x74] sm:$0xf]
    %v255 = vld [vmem:[#allocation8 + $0x78] sm:$0xf]
    %v256 = vld [vmem:[#allocation8 + $0x7c] sm:$0xf]
    %v257 = vld [vmem:[#allocation8 + $0x80] sm:$0xf]
    %v258 = vld [vmem:[#allocation8 + $0x84] sm:$0xf]
    %v259 = vld [vmem:[#allocation8 + $0x88] sm:$0xf]
    %v260 = vld [vmem:[#allocation8 + $0x8c] sm:$0xf]
    %v261 = vld [vmem:[#allocation8 + $0x90] sm:$0xf]
    %v262 = vld [vmem:[#allocation8 + $0x94] sm:$0xf]
    %v263 = vld [vmem:[#allocation8 + $0x98] sm:$0xf]
    %v264 = vld [vmem:[#allocation8 + $0x9c] sm:$0xf]
    %v265 = vld [vmem:[#allocation8 + $0xa0] sm:$0xf]
    %v266 = vld [vmem:[#allocation8 + $0xa4] sm:$0xf]
    %v267 = vld [vmem:[#allocation8 + $0xa8] sm:$0xf]
    %v268 = vld [vmem:[#allocation8 + $0xac] sm:$0xf]
    %v269 = vld [vmem:[#allocation8 + $0xb0] sm:$0xf]
    %v270 = vld [vmem:[#allocation8 + $0xb4] sm:$0xf]
    %v271 = vld [vmem:[#allocation8 + $0xb8] sm:$0xf]
    %v272 = vld [vmem:[#allocation8 + $0xbc] sm:$0xf]
    %v273 = vld [vmem:[%s2] sm:$0x1]
    %v275 = vlaneseq
    %v276 = vshrl.u32 %v275, 7
    %v277 = vsub.s32 0, %v276
    %v278 = vrot.slane %v273, %v277
    %v328 = vunpack.c.l.b16 %v225
    %v329 = vunpack.c.l.b16 %v226
    %v330 = vunpack.c.l.b16 %v227
    %v331 = vunpack.c.l.b16 %v228
    %v332 = vunpack.c.l.b16 %v229
    %v333 = vunpack.c.l.b16 %v230
    %v334 = vunpack.c.l.b16 %v231
    %v335 = vunpack.c.l.b16 %v232
    %v336 = vunpack.c.l.b16 %v233
    %v337 = vunpack.c.l.b16 %v234
    %v338 = vunpack.c.l.b16 %v235
    %v339 = vunpack.c.l.b16 %v236
    %v340 = vunpack.c.l.b16 %v237
    %v341 = vunpack.c.l.b16 %v238
    %v342 = vunpack.c.l.b16 %v239
    %v343 = vunpack.c.l.b16 %v240
    %v344 = vunpack.c.l.b16 %v241
    %v345 = vunpack.c.l.b16 %v242
    %v346 = vunpack.c.l.b16 %v243
    %v347 = vunpack.c.l.b16 %v244
    %v348 = vunpack.c.l.b16 %v245
    %v349 = vunpack.c.l.b16 %v246
    %v350 = vunpack.c.l.b16 %v247
    %v351 = vunpack.c.l.b16 %v248
    %v352 = vunpack.c.l.b16 %v249
    %v353 = vunpack.c.l.b16 %v250
    %v354 = vunpack.c.l.b16 %v251
    %v355 = vunpack.c.l.b16 %v252
    %v356 = vunpack.c.l.b16 %v253
    %v357 = vunpack.c.l.b16 %v254
    %v358 = vunpack.c.l.b16 %v255
    %v359 = vunpack.c.l.b16 %v256
    %v360 = vunpack.c.l.b16 %v257
    %v361 = vunpack.c.l.b16 %v258
    %v362 = vunpack.c.l.b16 %v259
    %v363 = vunpack.c.l.b16 %v260
    %v364 = vunpack.c.l.b16 %v261
    %v365 = vunpack.c.l.b16 %v262
    %v366 = vunpack.c.l.b16 %v263
    %v367 = vunpack.c.l.b16 %v264
    %v368 = vunpack.c.l.b16 %v265
    %v369 = vunpack.c.l.b16 %v266
    %v370 = vunpack.c.l.b16 %v267
    %v371 = vunpack.c.l.b16 %v268
    %v372 = vunpack.c.l.b16 %v269
    %v373 = vunpack.c.l.b16 %v270
    %v374 = vunpack.c.l.b16 %v271
    %v375 = vunpack.c.l.b16 %v272
    %v376 = vpack.c.b16 %v329, %v328
    %v377 = vpack.c.b16 %v331, %v330
    %v378 = vpack.c.b16 %v333, %v332
    %v379 = vpack.c.b16 %v335, %v334
    %v380 = vpack.c.b16 %v337, %v336
    %v381 = vpack.c.b16 %v339, %v338
    %v382 = vpack.c.b16 %v341, %v340
    %v383 = vpack.c.b16 %v343, %v342
    %v384 = vpack.c.b16 %v345, %v344
    %v385 = vpack.c.b16 %v347, %v346
    %v386 = vpack.c.b16 %v349, %v348
    %v387 = vpack.c.b16 %v351, %v350
    %v388 = vpack.c.b16 %v353, %v352
    %v389 = vpack.c.b16 %v355, %v354
    %v390 = vpack.c.b16 %v357, %v356
    %v391 = vpack.c.b16 %v359, %v358
    %v392 = vpack.c.b16 %v361, %v360
    %v393 = vpack.c.b16 %v363, %v362
    %v394 = vpack.c.b16 %v365, %v364
    %v395 = vpack.c.b16 %v367, %v366
    %v396 = vpack.c.b16 %v369, %v368
    %v397 = vpack.c.b16 %v371, %v370
    %v398 = vpack.c.b16 %v373, %v372
    %v399 = vpack.c.b16 %v375, %v374
    %424 = vmatprep.subr.bf16.mxu0 0
    %425 = vmatpush1.bf16.msra.mxu0 %v376
    %426 = vmatprep.subr.bf16.mxu0 0
    %427 = vmatpush1.bf16.msra.mxu0 %v377
    %428 = vmatprep.subr.bf16.mxu0 0
    %429 = vmatpush1.bf16.msra.mxu0 %v378
    %430 = vmatprep.subr.bf16.mxu0 0
    %431 = vmatpush1.bf16.msra.mxu0 %v379
    %432 = vmatprep.subr.bf16.mxu0 0
    %433 = vmatpush1.bf16.msra.mxu0 %v380
    %434 = vmatprep.subr.bf16.mxu0 0
    %435 = vmatpush1.bf16.msra.mxu0 %v381
    %436 = vmatprep.subr.bf16.mxu0 0
    %437 = vmatpush1.bf16.msra.mxu0 %v382
    %438 = vmatprep.subr.bf16.mxu0 0
    %439 = vmatpush1.bf16.msra.mxu0 %v383
    %440 = vmatprep.subr.bf16.mxu0 0
    %441 = vmatpush1.bf16.msra.mxu0 %v384
    %442 = vmatprep.subr.bf16.mxu0 0
    %443 = vmatpush1.bf16.msra.mxu0 %v385
    %444 = vmatprep.subr.bf16.mxu0 0
    %445 = vmatpush1.bf16.msra.mxu0 %v386
    %446 = vmatprep.subr.bf16.mxu0 0
    %447 = vmatpush1.bf16.msra.mxu0 %v387
    %448 = vmatprep.subr.bf16.mxu0 0
    %449 = vmatpush1.bf16.msra.mxu0 %v388
    %450 = vmatprep.subr.bf16.mxu0 0
    %451 = vmatpush1.bf16.msra.mxu0 %v389
    %452 = vmatprep.subr.bf16.mxu0 0
    %453 = vmatpush1.bf16.msra.mxu0 %v390
    %454 = vmatprep.subr.bf16.mxu0 0
    %455 = vmatpush1.bf16.msra.mxu0 %v391
    %456 = vmatprep.mubr.bf16.mxu0 %v220
    %457 = vmatmul.mubr.bf16.gmra.mrb[0].mxu0 %v219
    %v458 = vpop.f32.mrb[0].mxu0
    %v459 = vadd.f32 %v278, %v458
    %v460 = vpop.f32.mrb[0].mxu0
    %v461 = vpop.f32.mrb[0].mxu0
    %v462 = vadd.f32 %v278, %v461
    %v463 = vpop.f32.mrb[0].mxu0
    %464 = vmatprep.mubr.bf16.mxu0 %v223
    %465 = vmatmul.mubr.bf16.gmra.mrb[0].mxu0 %v222
    %v466 = vpop.f32.mrb[0].mxu0
    %v467 = vadd.f32 %v278, %v466
    %v468 = vpop.f32.mrb[0].mxu0
    %v469 = vpop.f32.mrb[0].mxu0
    %v470 = vadd.f32 %v278, %v469
    %v471 = vpop.f32.mrb[0].mxu0
    %472 = vdwg.mxu0
    %473 = vmatprep.subr.bf16.mxu0 0
    %474 = vmatpush1.bf16.msra.mxu0 %v392
    %475 = vmatprep.subr.bf16.mxu0 0
    %476 = vmatpush1.bf16.msra.mxu0 %v393
    %477 = vmatprep.subr.bf16.mxu0 0
    %478 = vmatpush1.bf16.msra.mxu0 %v394
    %479 = vmatprep.subr.bf16.mxu0 0
    %480 = vmatpush1.bf16.msra.mxu0 %v395
    %481 = vmatprep.subr.bf16.mxu0 0
    %482 = vmatpush1.bf16.msra.mxu0 %v396
    %483 = vmatprep.subr.bf16.mxu0 0
    %484 = vmatpush1.bf16.msra.mxu0 %v397
    %485 = vmatprep.subr.bf16.mxu0 0
    %486 = vmatpush1.bf16.msra.mxu0 %v398
    %487 = vmatprep.subr.bf16.mxu0 0
    %488 = vmatpush1.bf16.msra.mxu0 %v399
    %489 = vmatprep.subr.bf16.mxu0 0
    %490 = vmatpush1.bf16.msra.mxu0 0
    %491 = vmatprep.subr.bf16.mxu0 0
    %492 = vmatpush1.bf16.msra.mxu0 0
    %493 = vmatprep.subr.bf16.mxu0 0
    %494 = vmatpush1.bf16.msra.mxu0 0
    %495 = vmatprep.subr.bf16.mxu0 0
    %496 = vmatpush1.bf16.msra.mxu0 0
    %497 = vmatprep.subr.bf16.mxu0 0
    %498 = vmatpush1.bf16.msra.mxu0 0
    %499 = vmatprep.subr.bf16.mxu0 0
    %500 = vmatpush1.bf16.msra.mxu0 0
    %501 = vmatprep.subr.bf16.mxu0 0
    %502 = vmatpush1.bf16.msra.mxu0 0
    %503 = vmatprep.subr.bf16.mxu0 0
    %504 = vmatpush1.bf16.msra.mxu0 0
    %505 = vmatprep.mubr.bf16.mxu0 0
    %506 = vmatmul.mubr.bf16.gmra.mrb[0].mxu0 %v221
    %v507 = vpop.f32.mrb[0].mxu0
    %v508 = vadd.f32 %v459, %v507
    %v509 = vpop.f32.mrb[0].mxu0
    %v510 = vpop.f32.mrb[0].mxu0
    %v511 = vadd.f32 %v462, %v510
    %v512 = vpop.f32.mrb[0].mxu0
    %513 = vmatprep.mubr.bf16.mxu0 0
    %514 = vmatmul.mubr.bf16.gmra.mrb[0].mxu0 %v224
    %v515 = vpop.f32.mrb[0].mxu0
    %v516 = vadd.f32 %v467, %v515
    %v517 = vpop.f32.mrb[0].mxu0
    %v518 = vpop.f32.mrb[0].mxu0
    %v519 = vadd.f32 %v470, %v518
    %v520 = vpop.f32.mrb[0].mxu0
    %521 = vdwg.mxu0
    %v522 = vmax.f32 %v508, 0.0
    %v523 = vmax.f32 %v511, 0.0
    %v524 = vmax.f32 %v516, 0.0
    %v525 = vmax.f32 %v519, 0.0
    %v526 = vpack.c.bf16 %v523, %v522
    %v527 = vpack.c.bf16 %v525, %v524
    %528 = vst [vmem:[#allocation3 + $0x8] sm:$0xff] %v526
    %529 = vst [vmem:[#allocation3 + $0x18] sm:$0xff] %v527
    %v530 = vld [vmem:[#allocation3] sm:$0x80]
    %v531 = vld [vmem:[#allocation3 + $0x8] sm:$0x7f]
    %v532 = vld [vmem:[#allocation3 + $0x10] sm:$0x80]
    %v533 = vld [vmem:[#allocation3 + $0x18] sm:$0x7f]
    %v538 = vrot.slane %v530, 7
    %v539 = vrot.slane %v531, 7
    %v540 = vsel %vm171, %v538, %v539
    %v541 = vrot.slane %v532, 7
    %v542 = vrot.slane %v533, 7
    %v543 = vsel %vm171, %v541, %v542
    %546 = vst [vmem:[#allocation4] sm:$0xff] %v540
    %547 = vst [vmem:[#allocation4 + $0x18] sm:$0xff] %v543
    %v548 = vld [vmem:[#allocation3] sm:$0x80]
    %v549 = vld [vmem:[#allocation3 + $0x8] sm:$0xff]
    %v550 = vld [vmem:[#allocation3 + $0x10] sm:$0x80]
    %v551 = vld [vmem:[#allocation3 + $0x18] sm:$0xff]
    %v553 = vshrl.u32 %v548, 16
    %v555 = vrot.slane %v553, 7
    %v557 = vshrl.u32 %v549, 16
    %v559 = vrot.slane %v557, 7
    %v560 = vshll.u32 %v549, 16
    %v562 = vor.u32 %v559, %v560
    %v563 = vsel %vm186, %v555, %v562
    %v565 = vshrl.u32 %v550, 16
    %v567 = vrot.slane %v565, 7
    %v569 = vshrl.u32 %v551, 16
    %v571 = vrot.slane %v569, 7
    %v572 = vshll.u32 %v551, 16
    %v574 = vor.u32 %v571, %v572
    %v575 = vsel %vm186, %v567, %v574
    %578 = vst [vmem:[#allocation4 + $0x8] sm:$0xff] %v563
    %579 = vst [vmem:[#allocation4 + $0x20] sm:$0xff] %v575
    %v580 = vld [vmem:[#allocation3 + $0x8] sm:$0xff]
    %v581 = vld [vmem:[#allocation3 + $0x18] sm:$0xff]
    %582 = vst [vmem:[#allocation4 + $0x10] sm:$0xff] %v580
    %583 = vst [vmem:[#allocation4 + $0x28] sm:$0xff] %v581
    %v584 = vld [vmem:[#allocation4] sm:$0xff]
    %v585 = vld [vmem:[#allocation4 + $0x8] sm:$0xff]
    %v586 = vld [vmem:[#allocation4 + $0x10] sm:$0xff]
    %v587 = vld [vmem:[#allocation4 + $0x18] sm:$0xff]
    %v588 = vld [vmem:[#allocation4 + $0x20] sm:$0xff]
    %v589 = vld [vmem:[#allocation4 + $0x28] sm:$0xff]
    %v590 = vld [vmem:[#allocation10] sm:$0xf]
    %v591 = vld [vmem:[#allocation10 + $0x4] sm:$0xf]
    %v592 = vld [vmem:[#allocation10 + $0x8] sm:$0xf]
    %v593 = vld [vmem:[#allocation10 + $0xc] sm:$0xf]
    %v594 = vld [vmem:[#allocation10 + $0x10] sm:$0xf]
    %v595 = vld [vmem:[#allocation10 + $0x14] sm:$0xf]
    %v596 = vld [vmem:[#allocation10 + $0x18] sm:$0xf]
    %v597 = vld [vmem:[#allocation10 + $0x1c] sm:$0xf]
    %v598 = vld [vmem:[#allocation10 + $0x20] sm:$0xf]
    %v599 = vld [vmem:[#allocation10 + $0x24] sm:$0xf]
    %v600 = vld [vmem:[#allocation10 + $0x28] sm:$0xf]
    %v601 = vld [vmem:[#allocation10 + $0x2c] sm:$0xf]
    %v602 = vld [vmem:[#allocation10 + $0x30] sm:$0xf]
    %v603 = vld [vmem:[#allocation10 + $0x34] sm:$0xf]
    %v604 = vld [vmem:[#allocation10 + $0x38] sm:$0xf]
    %v605 = vld [vmem:[#allocation10 + $0x3c] sm:$0xf]
    %v606 = vld [vmem:[#allocation10 + $0x40] sm:$0xf]
    %v607 = vld [vmem:[#allocation10 + $0x44] sm:$0xf]
    %v608 = vld [vmem:[#allocation10 + $0x48] sm:$0xf]
    %v609 = vld [vmem:[#allocation10 + $0x4c] sm:$0xf]
    %v610 = vld [vmem:[#allocation10 + $0x50] sm:$0xf]
    %v611 = vld [vmem:[#allocation10 + $0x54] sm:$0xf]
    %v612 = vld [vmem:[#allocation10 + $0x58] sm:$0xf]
    %v613 = vld [vmem:[#allocation10 + $0x5c] sm:$0xf]
    %v614 = vld [vmem:[#allocation10 + $0x60] sm:$0xf]
    %v615 = vld [vmem:[#allocation10 + $0x64] sm:$0xf]
    %v616 = vld [vmem:[#allocation10 + $0x68] sm:$0xf]
    %v617 = vld [vmem:[#allocation10 + $0x6c] sm:$0xf]
    %v618 = vld [vmem:[#allocation10 + $0x70] sm:$0xf]
    %v619 = vld [vmem:[#allocation10 + $0x74] sm:$0xf]
    %v620 = vld [vmem:[#allocation10 + $0x78] sm:$0xf]
    %v621 = vld [vmem:[#allocation10 + $0x7c] sm:$0xf]
    %v622 = vld [vmem:[#allocation10 + $0x80] sm:$0xf]
    %v623 = vld [vmem:[#allocation10 + $0x84] sm:$0xf]
    %v624 = vld [vmem:[#allocation10 + $0x88] sm:$0xf]
    %v625 = vld [vmem:[#allocation10 + $0x8c] sm:$0xf]
    %v626 = vld [vmem:[#allocation10 + $0x90] sm:$0xf]
    %v627 = vld [vmem:[#allocation10 + $0x94] sm:$0xf]
    %v628 = vld [vmem:[#allocation10 + $0x98] sm:$0xf]
    %v629 = vld [vmem:[#allocation10 + $0x9c] sm:$0xf]
    %v630 = vld [vmem:[#allocation10 + $0xa0] sm:$0xf]
    %v631 = vld [vmem:[#allocation10 + $0xa4] sm:$0xf]
    %v632 = vld [vmem:[#allocation10 + $0xa8] sm:$0xf]
    %v633 = vld [vmem:[#allocation10 + $0xac] sm:$0xf]
    %v634 = vld [vmem:[#allocation10 + $0xb0] sm:$0xf]
    %v635 = vld [vmem:[#allocation10 + $0xb4] sm:$0xf]
    %v636 = vld [vmem:[#allocation10 + $0xb8] sm:$0xf]
    %v637 = vld [vmem:[#allocation10 + $0xbc] sm:$0xf]
    %v638 = vld [vmem:[%s4] sm:$0x1]
    %v640 = vlaneseq
    %v641 = vshrl.u32 %v640, 7
    %v642 = vsub.s32 0, %v641
    %v643 = vrot.slane %v638, %v642
    %v693 = vunpack.c.l.b16 %v590
    %v694 = vunpack.c.l.b16 %v591
    %v695 = vunpack.c.l.b16 %v592
    %v696 = vunpack.c.l.b16 %v593
    %v697 = vunpack.c.l.b16 %v594
    %v698 = vunpack.c.l.b16 %v595
    %v699 = vunpack.c.l.b16 %v596
    %v700 = vunpack.c.l.b16 %v597
    %v701 = vunpack.c.l.b16 %v598
    %v702 = vunpack.c.l.b16 %v599
    %v703 = vunpack.c.l.b16 %v600
    %v704 = vunpack.c.l.b16 %v601
    %v705 = vunpack.c.l.b16 %v602
    %v706 = vunpack.c.l.b16 %v603
    %v707 = vunpack.c.l.b16 %v604
    %v708 = vunpack.c.l.b16 %v605
    %v709 = vunpack.c.l.b16 %v606
    %v710 = vunpack.c.l.b16 %v607
    %v711 = vunpack.c.l.b16 %v608
    %v712 = vunpack.c.l.b16 %v609
    %v713 = vunpack.c.l.b16 %v610
    %v714 = vunpack.c.l.b16 %v611
    %v715 = vunpack.c.l.b16 %v612
    %v716 = vunpack.c.l.b16 %v613
    %v717 = vunpack.c.l.b16 %v614
    %v718 = vunpack.c.l.b16 %v615
    %v719 = vunpack.c.l.b16 %v616
    %v720 = vunpack.c.l.b16 %v617
    %v721 = vunpack.c.l.b16 %v618
    %v722 = vunpack.c.l.b16 %v619
    %v723 = vunpack.c.l.b16 %v620
    %v724 = vunpack.c.l.b16 %v621
    %v725 = vunpack.c.l.b16 %v622
    %v726 = vunpack.c.l.b16 %v623
    %v727 = vunpack.c.l.b16 %v624
    %v728 = vunpack.c.l.b16 %v625
    %v729 = vunpack.c.l.b16 %v626
    %v730 = vunpack.c.l.b16 %v627
    %v731 = vunpack.c.l.b16 %v628
    %v732 = vunpack.c.l.b16 %v629
    %v733 = vunpack.c.l.b16 %v630
    %v734 = vunpack.c.l.b16 %v631
    %v735 = vunpack.c.l.b16 %v632
    %v736 = vunpack.c.l.b16 %v633
    %v737 = vunpack.c.l.b16 %v634
    %v738 = vunpack.c.l.b16 %v635
    %v739 = vunpack.c.l.b16 %v636
    %v740 = vunpack.c.l.b16 %v637
    %v741 = vpack.c.b16 %v694, %v693
    %v742 = vpack.c.b16 %v696, %v695
    %v743 = vpack.c.b16 %v698, %v697
    %v744 = vpack.c.b16 %v700, %v699
    %v745 = vpack.c.b16 %v702, %v701
    %v746 = vpack.c.b16 %v704, %v703
    %v747 = vpack.c.b16 %v706, %v705
    %v748 = vpack.c.b16 %v708, %v707
    %v749 = vpack.c.b16 %v710, %v709
    %v750 = vpack.c.b16 %v712, %v711
    %v751 = vpack.c.b16 %v714, %v713
    %v752 = vpack.c.b16 %v716, %v715
    %v753 = vpack.c.b16 %v718, %v717
    %v754 = vpack.c.b16 %v720, %v719
    %v755 = vpack.c.b16 %v722, %v721
    %v756 = vpack.c.b16 %v724, %v723
    %v757 = vpack.c.b16 %v726, %v725
    %v758 = vpack.c.b16 %v728, %v727
    %v759 = vpack.c.b16 %v730, %v729
    %v760 = vpack.c.b16 %v732, %v731
    %v761 = vpack.c.b16 %v734, %v733
    %v762 = vpack.c.b16 %v736, %v735
    %v763 = vpack.c.b16 %v738, %v737
    %v764 = vpack.c.b16 %v740, %v739
    %789 = vmatprep.subr.bf16.mxu0 0
    %790 = vmatpush1.bf16.msra.mxu0 %v741
    %791 = vmatprep.subr.bf16.mxu0 0
    %792 = vmatpush1.bf16.msra.mxu0 %v742
    %793 = vmatprep.subr.bf16.mxu0 0
    %794 = vmatpush1.bf16.msra.mxu0 %v743
    %795 = vmatprep.subr.bf16.mxu0 0
    %796 = vmatpush1.bf16.msra.mxu0 %v744
    %797 = vmatprep.subr.bf16.mxu0 0
    %798 = vmatpush1.bf16.msra.mxu0 %v745
    %799 = vmatprep.subr.bf16.mxu0 0
    %800 = vmatpush1.bf16.msra.mxu0 %v746
    %801 = vmatprep.subr.bf16.mxu0 0
    %802 = vmatpush1.bf16.msra.mxu0 %v747
    %803 = vmatprep.subr.bf16.mxu0 0
    %804 = vmatpush1.bf16.msra.mxu0 %v748
    %805 = vmatprep.subr.bf16.mxu0 0
    %806 = vmatpush1.bf16.msra.mxu0 %v749
    %807 = vmatprep.subr.bf16.mxu0 0
    %808 = vmatpush1.bf16.msra.mxu0 %v750
    %809 = vmatprep.subr.bf16.mxu0 0
    %810 = vmatpush1.bf16.msra.mxu0 %v751
    %811 = vmatprep.subr.bf16.mxu0 0
    %812 = vmatpush1.bf16.msra.mxu0 %v752
    %813 = vmatprep.subr.bf16.mxu0 0
    %814 = vmatpush1.bf16.msra.mxu0 %v753
    %815 = vmatprep.subr.bf16.mxu0 0
    %816 = vmatpush1.bf16.msra.mxu0 %v754
    %817 = vmatprep.subr.bf16.mxu0 0
    %818 = vmatpush1.bf16.msra.mxu0 %v755
    %819 = vmatprep.subr.bf16.mxu0 0
    %820 = vmatpush1.bf16.msra.mxu0 %v756
    %821 = vmatprep.mubr.bf16.mxu0 %v585
    %822 = vmatmul.mubr.bf16.gmra.mrb[0].mxu0 %v584
    %v823 = vpop.f32.mrb[0].mxu0
    %v824 = vadd.f32 %v643, %v823
    %v825 = vpop.f32.mrb[0].mxu0
    %v826 = vpop.f32.mrb[0].mxu0
    %v827 = vadd.f32 %v643, %v826
    %v828 = vpop.f32.mrb[0].mxu0
    %829 = vmatprep.mubr.bf16.mxu0 %v588
    %830 = vmatmul.mubr.bf16.gmra.mrb[0].mxu0 %v587
    %v831 = vpop.f32.mrb[0].mxu0
    %v832 = vadd.f32 %v643, %v831
    %v833 = vpop.f32.mrb[0].mxu0
    %v834 = vpop.f32.mrb[0].mxu0
    %v835 = vadd.f32 %v643, %v834
    %v836 = vpop.f32.mrb[0].mxu0
    %837 = vdwg.mxu0
    %838 = vmatprep.subr.bf16.mxu0 0
    %839 = vmatpush1.bf16.msra.mxu0 %v757
    %840 = vmatprep.subr.bf16.mxu0 0
    %841 = vmatpush1.bf16.msra.mxu0 %v758
    %842 = vmatprep.subr.bf16.mxu0 0
    %843 = vmatpush1.bf16.msra.mxu0 %v759
    %844 = vmatprep.subr.bf16.mxu0 0
    %845 = vmatpush1.bf16.msra.mxu0 %v760
    %846 = vmatprep.subr.bf16.mxu0 0
    %847 = vmatpush1.bf16.msra.mxu0 %v761
    %848 = vmatprep.subr.bf16.mxu0 0
    %849 = vmatpush1.bf16.msra.mxu0 %v762
    %850 = vmatprep.subr.bf16.mxu0 0
    %851 = vmatpush1.bf16.msra.mxu0 %v763
    %852 = vmatprep.subr.bf16.mxu0 0
    %853 = vmatpush1.bf16.msra.mxu0 %v764
    %854 = vmatprep.subr.bf16.mxu0 0
    %855 = vmatpush1.bf16.msra.mxu0 0
    %856 = vmatprep.subr.bf16.mxu0 0
    %857 = vmatpush1.bf16.msra.mxu0 0
    %858 = vmatprep.subr.bf16.mxu0 0
    %859 = vmatpush1.bf16.msra.mxu0 0
    %860 = vmatprep.subr.bf16.mxu0 0
    %861 = vmatpush1.bf16.msra.mxu0 0
    %862 = vmatprep.subr.bf16.mxu0 0
    %863 = vmatpush1.bf16.msra.mxu0 0
    %864 = vmatprep.subr.bf16.mxu0 0
    %865 = vmatpush1.bf16.msra.mxu0 0
    %866 = vmatprep.subr.bf16.mxu0 0
    %867 = vmatpush1.bf16.msra.mxu0 0
    %868 = vmatprep.subr.bf16.mxu0 0
    %869 = vmatpush1.bf16.msra.mxu0 0
    %870 = vmatprep.mubr.bf16.mxu0 0
    %871 = vmatmul.mubr.bf16.gmra.mrb[0].mxu0 %v586
    %v872 = vpop.f32.mrb[0].mxu0
    %v873 = vadd.f32 %v824, %v872
    %v874 = vpop.f32.mrb[0].mxu0
    %v875 = vpop.f32.mrb[0].mxu0
    %v876 = vadd.f32 %v827, %v875
    %v877 = vpop.f32.mrb[0].mxu0
    %878 = vmatprep.mubr.bf16.mxu0 0
    %879 = vmatmul.mubr.bf16.gmra.mrb[0].mxu0 %v589
    %v880 = vpop.f32.mrb[0].mxu0
    %v881 = vadd.f32 %v832, %v880
    %v882 = vpop.f32.mrb[0].mxu0
    %v883 = vpop.f32.mrb[0].mxu0
    %v884 = vadd.f32 %v835, %v883
    %v885 = vpop.f32.mrb[0].mxu0
    %886 = vdwg.mxu0
    %v887 = vmax.f32 %v873, 0.0
    %v888 = vmax.f32 %v876, 0.0
    %v889 = vmax.f32 %v881, 0.0
    %v890 = vmax.f32 %v884, 0.0
    %v891 = vld [vmem:[#allocation2 + $0x8] sm:$0xff]
    %v892 = vld [vmem:[#allocation2 + $0x18] sm:$0xff]
    %v893 = vld [vmem:[#allocation11] sm:$0xf]
    %v894 = vld [vmem:[#allocation11 + $0x4] sm:$0xf]
    %v895 = vld [vmem:[#allocation11 + $0x8] sm:$0xf]
    %v896 = vld [vmem:[#allocation11 + $0xc] sm:$0xf]
    %v897 = vld [vmem:[#allocation11 + $0x10] sm:$0xf]
    %v898 = vld [vmem:[#allocation11 + $0x14] sm:$0xf]
    %v899 = vld [vmem:[#allocation11 + $0x18] sm:$0xf]
    %v900 = vld [vmem:[#allocation11 + $0x1c] sm:$0xf]
    %v901 = vld [vmem:[#allocation11 + $0x20] sm:$0xf]
    %v902 = vld [vmem:[#allocation11 + $0x24] sm:$0xf]
    %v903 = vld [vmem:[#allocation11 + $0x28] sm:$0xf]
    %v904 = vld [vmem:[#allocation11 + $0x2c] sm:$0xf]
    %v905 = vld [vmem:[#allocation11 + $0x30] sm:$0xf]
    %v906 = vld [vmem:[#allocation11 + $0x34] sm:$0xf]
    %v907 = vld [vmem:[#allocation11 + $0x38] sm:$0xf]
    %v908 = vld [vmem:[#allocation11 + $0x3c] sm:$0xf]
    %v909 = vld [vmem:[%s6] sm:$0x1]
    %v911 = vlaneseq
    %v912 = vshrl.u32 %v911, 7
    %v913 = vsub.s32 0, %v912
    %v914 = vrot.slane %v909, %v913
    %v932 = vunpack.c.l.b16 %v893
    %v933 = vunpack.c.l.b16 %v894
    %v934 = vunpack.c.l.b16 %v895
    %v935 = vunpack.c.l.b16 %v896
    %v936 = vunpack.c.l.b16 %v897
    %v937 = vunpack.c.l.b16 %v898
    %v938 = vunpack.c.l.b16 %v899
    %v939 = vunpack.c.l.b16 %v900
    %v940 = vunpack.c.l.b16 %v901
    %v941 = vunpack.c.l.b16 %v902
    %v942 = vunpack.c.l.b16 %v903
    %v943 = vunpack.c.l.b16 %v904
    %v944 = vunpack.c.l.b16 %v905
    %v945 = vunpack.c.l.b16 %v906
    %v946 = vunpack.c.l.b16 %v907
    %v947 = vunpack.c.l.b16 %v908
    %v948 = vpack.c.b16 %v933, %v932
    %v949 = vpack.c.b16 %v935, %v934
    %v950 = vpack.c.b16 %v937, %v936
    %v951 = vpack.c.b16 %v939, %v938
    %v952 = vpack.c.b16 %v941, %v940
    %v953 = vpack.c.b16 %v943, %v942
    %v954 = vpack.c.b16 %v945, %v944
    %v955 = vpack.c.b16 %v947, %v946
    %964 = vmatprep.subr.bf16.mxu0 0
    %965 = vmatpush1.bf16.msra.mxu0 %v948
    %966 = vmatprep.subr.bf16.mxu0 0
    %967 = vmatpush1.bf16.msra.mxu0 %v949
    %968 = vmatprep.subr.bf16.mxu0 0
    %969 = vmatpush1.bf16.msra.mxu0 %v950
    %970 = vmatprep.subr.bf16.mxu0 0
    %971 = vmatpush1.bf16.msra.mxu0 %v951
    %972 = vmatprep.subr.bf16.mxu0 0
    %973 = vmatpush1.bf16.msra.mxu0 %v952
    %974 = vmatprep.subr.bf16.mxu0 0
    %975 = vmatpush1.bf16.msra.mxu0 %v953
    %976 = vmatprep.subr.bf16.mxu0 0
    %977 = vmatpush1.bf16.msra.mxu0 %v954
    %978 = vmatprep.subr.bf16.mxu0 0
    %979 = vmatpush1.bf16.msra.mxu0 %v955
    %980 = vmatprep.subr.bf16.mxu0 0
    %981 = vmatpush1.bf16.msra.mxu0 0
    %982 = vmatprep.subr.bf16.mxu0 0
    %983 = vmatpush1.bf16.msra.mxu0 0
    %984 = vmatprep.subr.bf16.mxu0 0
    %985 = vmatpush1.bf16.msra.mxu0 0
    %986 = vmatprep.subr.bf16.mxu0 0
    %987 = vmatpush1.bf16.msra.mxu0 0
    %988 = vmatprep.subr.bf16.mxu0 0
    %989 = vmatpush1.bf16.msra.mxu0 0
    %990 = vmatprep.subr.bf16.mxu0 0
    %991 = vmatpush1.bf16.msra.mxu0 0
    %992 = vmatprep.subr.bf16.mxu0 0
    %993 = vmatpush1.bf16.msra.mxu0 0
    %994 = vmatprep.subr.bf16.mxu0 0
    %995 = vmatpush1.bf16.msra.mxu0 0
    %996 = vmatprep.mubr.bf16.mxu0 0
    %997 = vmatmul.mubr.bf16.gmra.mrb[0].mxu0 %v891
    %v998 = vpop.f32.mrb[0].mxu0
    %v999 = vadd.f32 %v914, %v998
    %v1000 = vpop.f32.mrb[0].mxu0
    %v1001 = vpop.f32.mrb[0].mxu0
    %v1002 = vadd.f32 %v914, %v1001
    %v1003 = vpop.f32.mrb[0].mxu0
    %1004 = vmatprep.mubr.bf16.mxu0 0
    %1005 = vmatmul.mubr.bf16.gmra.mrb[0].mxu0 %v892
    %v1006 = vpop.f32.mrb[0].mxu0
    %v1007 = vadd.f32 %v914, %v1006
    %v1008 = vpop.f32.mrb[0].mxu0
    %v1009 = vpop.f32.mrb[0].mxu0
    %v1010 = vadd.f32 %v914, %v1009
    %v1011 = vpop.f32.mrb[0].mxu0
    %1012 = vdwg.mxu0
    %v1013 = vadd.f32 %v887, %v999
    %v1014 = vadd.f32 %v888, %v1002
    %v1015 = vadd.f32 %v889, %v1007
    %v1016 = vadd.f32 %v890, %v1010
    %v1017 = vmax.f32 %v1013, 0.0
    %v1018 = vmax.f32 %v1014, 0.0
    %v1019 = vmax.f32 %v1015, 0.0
    %v1020 = vmax.f32 %v1016, 0.0
    %v1021 = vpack.c.bf16 %v1018, %v1017
    %v1022 = vpack.c.bf16 %v1020, %v1019
    %1023 = vst [vmem:[#allocation2 + $0x8] sm:$0xff] %v1021
    %1024 = vst [vmem:[#allocation2 + $0x18] sm:$0xff] %v1022
    %v1025 = vld [vmem:[#allocation2] sm:$0xc0]
    %v1026 = vld [vmem:[#allocation2 + $0x8] sm:$0x3f]
    %v1027 = vld [vmem:[#allocation2 + $0x10] sm:$0xc0]
    %v1028 = vld [vmem:[#allocation2 + $0x18] sm:$0x3f]
    %vm1033 = vcmask 1041408
    %v1034 = vrot.slane %v1025, 6
    %v1035 = vrot.slane %v1026, 6
    %v1036 = vsel %vm1033, %v1034, %v1035
    %v1037 = vrot.slane %v1027, 6
    %v1038 = vrot.slane %v1028, 6
    %v1039 = vsel %vm1033, %v1037, %v1038
    %1042 = vst [vmem:[#allocation4] sm:$0xff] %v1036
    %1043 = vst [vmem:[#allocation4 + $0x18] sm:$0xff] %v1039
    %v1044 = vld [vmem:[#allocation2] sm:$0x80]
    %v1045 = vld [vmem:[#allocation2 + $0x8] sm:$0x7f]
    %v1046 = vld [vmem:[#allocation2 + $0x10] sm:$0x80]
    %v1047 = vld [vmem:[#allocation2 + $0x18] sm:$0x7f]
    %v1052 = vrot.slane %v1044, 7
    %v1053 = vrot.slane %v1045, 7
    %v1054 = vsel %vm171, %v1052, %v1053
    %v1055 = vrot.slane %v1046, 7
    %v1056 = vrot.slane %v1047, 7
    %v1057 = vsel %vm171, %v1055, %v1056
    %1060 = vst [vmem:[#allocation4 + $0x8] sm:$0xff] %v1054
    %1061 = vst [vmem:[#allocation4 + $0x20] sm:$0xff] %v1057
    %v1062 = vld [vmem:[#allocation2 + $0x8] sm:$0xff]
    %v1063 = vld [vmem:[#allocation2 + $0x18] sm:$0xff]
    %1064 = vst [vmem:[#allocation4 + $0x10] sm:$0xff] %v1062
    %1065 = vst [vmem:[#allocation4 + $0x28] sm:$0xff] %v1063
    %v1066 = vld [vmem:[#allocation4] sm:$0xff]
    %v1067 = vld [vmem:[#allocation4 + $0x8] sm:$0xff]
    %v1068 = vld [vmem:[#allocation4 + $0x10] sm:$0xff]
    %v1069 = vld [vmem:[#allocation4 + $0x18] sm:$0xff]
    %v1070 = vld [vmem:[#allocation4 + $0x20] sm:$0xff]
    %v1071 = vld [vmem:[#allocation4 + $0x28] sm:$0xff]
    %v1072 = vld [vmem:[#allocation13] sm:$0xf]
    %v1073 = vld [vmem:[#allocation13 + $0x4] sm:$0xf]
    %v1074 = vld [vmem:[#allocation13 + $0x8] sm:$0xf]
    %v1075 = vld [vmem:[#allocation13 + $0xc] sm:$0xf]
    %v1076 = vld [vmem:[#allocation13 + $0x10] sm:$0xf]
    %v1077 = vld [vmem:[#allocation13 + $0x14] sm:$0xf]
    %v1078 = vld [vmem:[#allocation13 + $0x18] sm:$0xf]
    %v1079 = vld [vmem:[#allocation13 + $0x1c] sm:$0xf]
    %v1080 = vld [vmem:[#allocation13 + $0x20] sm:$0xf]
    %v1081 = vld [vmem:[#allocation13 + $0x24] sm:$0xf]
    %v1082 = vld [vmem:[#allocation13 + $0x28] sm:$0xf]
    %v1083 = vld [vmem:[#allocation13 + $0x2c] sm:$0xf]
    %v1084 = vld [vmem:[#allocation13 + $0x30] sm:$0xf]
    %v1085 = vld [vmem:[#allocation13 + $0x34] sm:$0xf]
    %v1086 = vld [vmem:[#allocation13 + $0x38] sm:$0xf]
    %v1087 = vld [vmem:[#allocation13 + $0x3c] sm:$0xf]
    %v1088 = vld [vmem:[#allocation13 + $0x40] sm:$0xf]
    %v1089 = vld [vmem:[#allocation13 + $0x44] sm:$0xf]
    %v1090 = vld [vmem:[#allocation13 + $0x48] sm:$0xf]
    %v1091 = vld [vmem:[#allocation13 + $0x4c] sm:$0xf]
    %v1092 = vld [vmem:[#allocation13 + $0x50] sm:$0xf]
    %v1093 = vld [vmem:[#allocation13 + $0x54] sm:$0xf]
    %v1094 = vld [vmem:[#allocation13 + $0x58] sm:$0xf]
    %v1095 = vld [vmem:[#allocation13 + $0x5c] sm:$0xf]
    %v1096 = vld [vmem:[#allocation13 + $0x60] sm:$0xf]
    %v1097 = vld [vmem:[#allocation13 + $0x64] sm:$0xf]
    %v1098 = vld [vmem:[#allocation13 + $0x68] sm:$0xf]
    %v1099 = vld [vmem:[#allocation13 + $0x6c] sm:$0xf]
    %v1100 = vld [vmem:[#allocation13 + $0x70] sm:$0xf]
    %v1101 = vld [vmem:[#allocation13 + $0x74] sm:$0xf]
    %v1102 = vld [vmem:[#allocation13 + $0x78] sm:$0xf]
    %v1103 = vld [vmem:[#allocation13 + $0x7c] sm:$0xf]
    %v1104 = vld [vmem:[#allocation13 + $0x80] sm:$0xf]
    %v1105 = vld [vmem:[#allocation13 + $0x84] sm:$0xf]
    %v1106 = vld [vmem:[#allocation13 + $0x88] sm:$0xf]
    %v1107 = vld [vmem:[#allocation13 + $0x8c] sm:$0xf]
    %v1108 = vld [vmem:[#allocation13 + $0x90] sm:$0xf]
    %v1109 = vld [vmem:[#allocation13 + $0x94] sm:$0xf]
    %v1110 = vld [vmem:[#allocation13 + $0x98] sm:$0xf]
    %v1111 = vld [vmem:[#allocation13 + $0x9c] sm:$0xf]
    %v1112 = vld [vmem:[#allocation13 + $0xa0] sm:$0xf]
    %v1113 = vld [vmem:[#allocation13 + $0xa4] sm:$0xf]
    %v1114 = vld [vmem:[#allocation13 + $0xa8] sm:$0xf]
    %v1115 = vld [vmem:[#allocation13 + $0xac] sm:$0xf]
    %v1116 = vld [vmem:[#allocation13 + $0xb0] sm:$0xf]
    %v1117 = vld [vmem:[#allocation13 + $0xb4] sm:$0xf]
    %v1118 = vld [vmem:[#allocation13 + $0xb8] sm:$0xf]
    %v1119 = vld [vmem:[#allocation13 + $0xbc] sm:$0xf]
    %v1120 = vld [vmem:[%s8] sm:$0x1]
    %v1122 = vlaneseq
    %v1123 = vshrl.u32 %v1122, 7
    %v1124 = vsub.s32 0, %v1123
    %v1125 = vrot.slane %v1120, %v1124
    %v1175 = vunpack.c.l.b16 %v1072
    %v1176 = vunpack.c.l.b16 %v1073
    %v1177 = vunpack.c.l.b16 %v1074
    %v1178 = vunpack.c.l.b16 %v1075
    %v1179 = vunpack.c.l.b16 %v1076
    %v1180 = vunpack.c.l.b16 %v1077
    %v1181 = vunpack.c.l.b16 %v1078
    %v1182 = vunpack.c.l.b16 %v1079
    %v1183 = vunpack.c.l.b16 %v1080
    %v1184 = vunpack.c.l.b16 %v1081
    %v1185 = vunpack.c.l.b16 %v1082
    %v1186 = vunpack.c.l.b16 %v1083
    %v1187 = vunpack.c.l.b16 %v1084
    %v1188 = vunpack.c.l.b16 %v1085
    %v1189 = vunpack.c.l.b16 %v1086
    %v1190 = vunpack.c.l.b16 %v1087
    %v1191 = vunpack.c.l.b16 %v1088
    %v1192 = vunpack.c.l.b16 %v1089
    %v1193 = vunpack.c.l.b16 %v1090
    %v1194 = vunpack.c.l.b16 %v1091
    %v1195 = vunpack.c.l.b16 %v1092
    %v1196 = vunpack.c.l.b16 %v1093
    %v1197 = vunpack.c.l.b16 %v1094
    %v1198 = vunpack.c.l.b16 %v1095
    %v1199 = vunpack.c.l.b16 %v1096
    %v1200 = vunpack.c.l.b16 %v1097
    %v1201 = vunpack.c.l.b16 %v1098
    %v1202 = vunpack.c.l.b16 %v1099
    %v1203 = vunpack.c.l.b16 %v1100
    %v1204 = vunpack.c.l.b16 %v1101
    %v1205 = vunpack.c.l.b16 %v1102
    %v1206 = vunpack.c.l.b16 %v1103
    %v1207 = vunpack.c.l.b16 %v1104
    %v1208 = vunpack.c.l.b16 %v1105
    %v1209 = vunpack.c.l.b16 %v1106
    %v1210 = vunpack.c.l.b16 %v1107
    %v1211 = vunpack.c.l.b16 %v1108
    %v1212 = vunpack.c.l.b16 %v1109
    %v1213 = vunpack.c.l.b16 %v1110
    %v1214 = vunpack.c.l.b16 %v1111
    %v1215 = vunpack.c.l.b16 %v1112
    %v1216 = vunpack.c.l.b16 %v1113
    %v1217 = vunpack.c.l.b16 %v1114
    %v1218 = vunpack.c.l.b16 %v1115
    %v1219 = vunpack.c.l.b16 %v1116
    %v1220 = vunpack.c.l.b16 %v1117
    %v1221 = vunpack.c.l.b16 %v1118
    %v1222 = vunpack.c.l.b16 %v1119
    %v1223 = vpack.c.b16 %v1176, %v1175
    %v1224 = vpack.c.b16 %v1178, %v1177
    %v1225 = vpack.c.b16 %v1180, %v1179
    %v1226 = vpack.c.b16 %v1182, %v1181
    %v1227 = vpack.c.b16 %v1184, %v1183
    %v1228 = vpack.c.b16 %v1186, %v1185
    %v1229 = vpack.c.b16 %v1188, %v1187
    %v1230 = vpack.c.b16 %v1190, %v1189
    %v1231 = vpack.c.b16 %v1192, %v1191
    %v1232 = vpack.c.b16 %v1194, %v1193
    %v1233 = vpack.c.b16 %v1196, %v1195
    %v1234 = vpack.c.b16 %v1198, %v1197
    %v1235 = vpack.c.b16 %v1200, %v1199
    %v1236 = vpack.c.b16 %v1202, %v1201
    %v1237 = vpack.c.b16 %v1204, %v1203
    %v1238 = vpack.c.b16 %v1206, %v1205
    %v1239 = vpack.c.b16 %v1208, %v1207
    %v1240 = vpack.c.b16 %v1210, %v1209
    %v1241 = vpack.c.b16 %v1212, %v1211
    %v1242 = vpack.c.b16 %v1214, %v1213
    %v1243 = vpack.c.b16 %v1216, %v1215
    %v1244 = vpack.c.b16 %v1218, %v1217
    %v1245 = vpack.c.b16 %v1220, %v1219
    %v1246 = vpack.c.b16 %v1222, %v1221
    %1271 = vmatprep.subr.bf16.mxu0 0
    %1272 = vmatpush1.bf16.msra.mxu0 %v1223
    %1273 = vmatprep.subr.bf16.mxu0 0
    %1274 = vmatpush1.bf16.msra.mxu0 %v1224
    %1275 = vmatprep.subr.bf16.mxu0 0
    %1276 = vmatpush1.bf16.msra.mxu0 %v1225
    %1277 = vmatprep.subr.bf16.mxu0 0
    %1278 = vmatpush1.bf16.msra.mxu0 %v1226
    %1279 = vmatprep.subr.bf16.mxu0 0
    %1280 = vmatpush1.bf16.msra.mxu0 %v1227
    %1281 = vmatprep.subr.bf16.mxu0 0
    %1282 = vmatpush1.bf16.msra.mxu0 %v1228
    %1283 = vmatprep.subr.bf16.mxu0 0
    %1284 = vmatpush1.bf16.msra.mxu0 %v1229
    %1285 = vmatprep.subr.bf16.mxu0 0
    %1286 = vmatpush1.bf16.msra.mxu0 %v1230
    %1287 = vmatprep.subr.bf16.mxu0 0
    %1288 = vmatpush1.bf16.msra.mxu0 %v1231
    %1289 = vmatprep.subr.bf16.mxu0 0
    %1290 = vmatpush1.bf16.msra.mxu0 %v1232
    %1291 = vmatprep.subr.bf16.mxu0 0
    %1292 = vmatpush1.bf16.msra.mxu0 %v1233
    %1293 = vmatprep.subr.bf16.mxu0 0
    %1294 = vmatpush1.bf16.msra.mxu0 %v1234
    %1295 = vmatprep.subr.bf16.mxu0 0
    %1296 = vmatpush1.bf16.msra.mxu0 %v1235
    %1297 = vmatprep.subr.bf16.mxu0 0
    %1298 = vmatpush1.bf16.msra.mxu0 %v1236
    %1299 = vmatprep.subr.bf16.mxu0 0
    %1300 = vmatpush1.bf16.msra.mxu0 %v1237
    %1301 = vmatprep.subr.bf16.mxu0 0
    %1302 = vmatpush1.bf16.msra.mxu0 %v1238
    %1303 = vmatprep.mubr.bf16.mxu0 %v1067
    %1304 = vmatmul.mubr.bf16.gmra.mrb[0].mxu0 %v1066
    %v1305 = vpop.f32.mrb[0].mxu0
    %v1306 = vadd.f32 %v1125, %v1305
    %v1307 = vpop.f32.mrb[0].mxu0
    %v1308 = vpop.f32.mrb[0].mxu0
    %v1309 = vadd.f32 %v1125, %v1308
    %v1310 = vpop.f32.mrb[0].mxu0
    %1311 = vmatprep.mubr.bf16.mxu0 %v1070
    %1312 = vmatmul.mubr.bf16.gmra.mrb[0].mxu0 %v1069
    %v1313 = vpop.f32.mrb[0].mxu0
    %v1314 = vadd.f32 %v1125, %v1313
    %v1315 = vpop.f32.mrb[0].mxu0
    %v1316 = vpop.f32.mrb[0].mxu0
    %v1317 = vadd.f32 %v1125, %v1316
    %v1318 = vpop.f32.mrb[0].mxu0
    %1319 = vdwg.mxu0
    %1320 = vmatprep.subr.bf16.mxu0 0
    %1321 = vmatpush1.bf16.msra.mxu0 %v1239
    %1322 = vmatprep.subr.bf16.mxu0 0
    %1323 = vmatpush1.bf16.msra.mxu0 %v1240
    %1324 = vmatprep.subr.bf16.mxu0 0
    %1325 = vmatpush1.bf16.msra.mxu0 %v1241
    %1326 = vmatprep.subr.bf16.mxu0 0
    %1327 = vmatpush1.bf16.msra.mxu0 %v1242
    %1328 = vmatprep.subr.bf16.mxu0 0
    %1329 = vmatpush1.bf16.msra.mxu0 %v1243
    %1330 = vmatprep.subr.bf16.mxu0 0
    %1331 = vmatpush1.bf16.msra.mxu0 %v1244
    %1332 = vmatprep.subr.bf16.mxu0 0
    %1333 = vmatpush1.bf16.msra.mxu0 %v1245
    %1334 = vmatprep.subr.bf16.mxu0 0
    %1335 = vmatpush1.bf16.msra.mxu0 %v1246
    %1336 = vmatprep.subr.bf16.mxu0 0
    %1337 = vmatpush1.bf16.msra.mxu0 0
    %1338 = vmatprep.subr.bf16.mxu0 0
    %1339 = vmatpush1.bf16.msra.mxu0 0
    %1340 = vmatprep.subr.bf16.mxu0 0
    %1341 = vmatpush1.bf16.msra.mxu0 0
    %1342 = vmatprep.subr.bf16.mxu0 0
    %1343 = vmatpush1.bf16.msra.mxu0 0
    %1344 = vmatprep.subr.bf16.mxu0 0
    %1345 = vmatpush1.bf16.msra.mxu0 0
    %1346 = vmatprep.subr.bf16.mxu0 0
    %1347 = vmatpush1.bf16.msra.mxu0 0
    %1348 = vmatprep.subr.bf16.mxu0 0
    %1349 = vmatpush1.bf16.msra.mxu0 0
    %1350 = vmatprep.subr.bf16.mxu0 0
    %1351 = vmatpush1.bf16.msra.mxu0 0
    %1352 = vmatprep.mubr.bf16.mxu0 0
    %1353 = vmatmul.mubr.bf16.gmra.mrb[0].mxu0 %v1068
    %v1354 = vpop.f32.mrb[0].mxu0
    %v1355 = vadd.f32 %v1306, %v1354
    %v1356 = vpop.f32.mrb[0].mxu0
    %v1357 = vpop.f32.mrb[0].mxu0
    %v1358 = vadd.f32 %v1309, %v1357
    %v1359 = vpop.f32.mrb[0].mxu0
    %1360 = vmatprep.mubr.bf16.mxu0 0
    %1361 = vmatmul.mubr.bf16.gmra.mrb[0].mxu0 %v1071
    %v1362 = vpop.f32.mrb[0].mxu0
    %v1363 = vadd.f32 %v1314, %v1362
    %v1364 = vpop.f32.mrb[0].mxu0
    %v1365 = vpop.f32.mrb[0].mxu0
    %v1366 = vadd.f32 %v1317, %v1365
    %v1367 = vpop.f32.mrb[0].mxu0
    %1368 = vdwg.mxu0
    %v1369 = vmax.f32 %v1355, 0.0
    %v1370 = vmax.f32 %v1358, 0.0
    %v1371 = vmax.f32 %v1363, 0.0
    %v1372 = vmax.f32 %v1366, 0.0
    %v1373 = vpack.c.bf16 %v1370, %v1369
    %v1374 = vpack.c.bf16 %v1372, %v1371
    %1375 = vst [vmem:[#allocation3 + $0x8] sm:$0xff] %v1373
    %1376 = vst [vmem:[#allocation3 + $0x18] sm:$0xff] %v1374
    %v1377 = vld [vmem:[#allocation3] sm:$0xc0]
    %v1378 = vld [vmem:[#allocation3 + $0x8] sm:$0x3f]
    %v1379 = vld [vmem:[#allocation3 + $0x10] sm:$0xc0]
    %v1380 = vld [vmem:[#allocation3 + $0x18] sm:$0x3f]
    %v1385 = vrot.slane %v1377, 6
    %v1386 = vrot.slane %v1378, 6
    %v1387 = vsel %vm1033, %v1385, %v1386
    %v1388 = vrot.slane %v1379, 6
    %v1389 = vrot.slane %v1380, 6
    %v1390 = vsel %vm1033, %v1388, %v1389
    %1393 = vst [vmem:[#allocation4] sm:$0xff] %v1387
    %1394 = vst [vmem:[#allocation4 + $0x18] sm:$0xff] %v1390
    %v1395 = vld [vmem:[#allocation3] sm:$0x80]
    %v1396 = vld [vmem:[#allocation3 + $0x8] sm:$0x7f]
    %v1397 = vld [vmem:[#allocation3 + $0x10] sm:$0x80]
    %v1398 = vld [vmem:[#allocation3 + $0x18] sm:$0x7f]
    %v1403 = vrot.slane %v1395, 7
    %v1404 = vrot.slane %v1396, 7
    %v1405 = vsel %vm171, %v1403, %v1404
    %v1406 = vrot.slane %v1397, 7
    %v1407 = vrot.slane %v1398, 7
    %v1408 = vsel %vm171, %v1406, %v1407
    %1411 = vst [vmem:[#allocation4 + $0x8] sm:$0xff] %v1405
    %1412 = vst [vmem:[#allocation4 + $0x20] sm:$0xff] %v1408
    %v1413 = vld [vmem:[#allocation3 + $0x8] sm:$0xff]
    %v1414 = vld [vmem:[#allocation3 + $0x18] sm:$0xff]
    %1415 = vst [vmem:[#allocation4 + $0x10] sm:$0xff] %v1413
    %1416 = vst [vmem:[#allocation4 + $0x28] sm:$0xff] %v1414
    %v1417 = vld [vmem:[#allocation4] sm:$0xff]
    %v1418 = vld [vmem:[#allocation4 + $0x8] sm:$0xff]
    %v1419 = vld [vmem:[#allocation4 + $0x10] sm:$0xff]
    %v1420 = vld [vmem:[#allocation4 + $0x18] sm:$0xff]
    %v1421 = vld [vmem:[#allocation4 + $0x20] sm:$0xff]
    %v1422 = vld [vmem:[#allocation4 + $0x28] sm:$0xff]
    %v1423 = vld [vmem:[#allocation14] sm:$0xf]
    %v1424 = vld [vmem:[#allocation14 + $0x4] sm:$0xf]
    %v1425 = vld [vmem:[#allocation14 + $0x8] sm:$0xf]
    %v1426 = vld [vmem:[#allocation14 + $0xc] sm:$0xf]
    %v1427 = vld [vmem:[#allocation14 + $0x10] sm:$0xf]
    %v1428 = vld [vmem:[#allocation14 + $0x14] sm:$0xf]
    %v1429 = vld [vmem:[#allocation14 + $0x18] sm:$0xf]
    %v1430 = vld [vmem:[#allocation14 + $0x1c] sm:$0xf]
    %v1431 = vld [vmem:[#allocation14 + $0x20] sm:$0xf]
    %v1432 = vld [vmem:[#allocation14 + $0x24] sm:$0xf]
    %v1433 = vld [vmem:[#allocation14 + $0x28] sm:$0xf]
    %v1434 = vld [vmem:[#allocation14 + $0x2c] sm:$0xf]
    %v1435 = vld [vmem:[#allocation14 + $0x30] sm:$0xf]
    %v1436 = vld [vmem:[#allocation14 + $0x34] sm:$0xf]
    %v1437 = vld [vmem:[#allocation14 + $0x38] sm:$0xf]
    %v1438 = vld [vmem:[#allocation14 + $0x3c] sm:$0xf]
    %v1439 = vld [vmem:[#allocation14 + $0x40] sm:$0xf]
    %v1440 = vld [vmem:[#allocation14 + $0x44] sm:$0xf]
    %v1441 = vld [vmem:[#allocation14 + $0x48] sm:$0xf]
    %v1442 = vld [vmem:[#allocation14 + $0x4c] sm:$0xf]
    %v1443 = vld [vmem:[#allocation14 + $0x50] sm:$0xf]
    %v1444 = vld [vmem:[#allocation14 + $0x54] sm:$0xf]
    %v1445 = vld [vmem:[#allocation14 + $0x58] sm:$0xf]
    %v1446 = vld [vmem:[#allocation14 + $0x5c] sm:$0xf]
    %v1447 = vld [vmem:[#allocation14 + $0x60] sm:$0xf]
    %v1448 = vld [vmem:[#allocation14 + $0x64] sm:$0xf]
    %v1449 = vld [vmem:[#allocation14 + $0x68] sm:$0xf]
    %v1450 = vld [vmem:[#allocation14 + $0x6c] sm:$0xf]
    %v1451 = vld [vmem:[#allocation14 + $0x70] sm:$0xf]
    %v1452 = vld [vmem:[#allocation14 + $0x74] sm:$0xf]
    %v1453 = vld [vmem:[#allocation14 + $0x78] sm:$0xf]
    %v1454 = vld [vmem:[#allocation14 + $0x7c] sm:$0xf]
    %v1455 = vld [vmem:[#allocation14 + $0x80] sm:$0xf]
    %v1456 = vld [vmem:[#allocation14 + $0x84] sm:$0xf]
    %v1457 = vld [vmem:[#allocation14 + $0x88] sm:$0xf]
    %v1458 = vld [vmem:[#allocation14 + $0x8c] sm:$0xf]
    %v1459 = vld [vmem:[#allocation14 + $0x90] sm:$0xf]
    %v1460 = vld [vmem:[#allocation14 + $0x94] sm:$0xf]
    %v1461 = vld [vmem:[#allocation14 + $0x98] sm:$0xf]
    %v1462 = vld [vmem:[#allocation14 + $0x9c] sm:$0xf]
    %v1463 = vld [vmem:[#allocation14 + $0xa0] sm:$0xf]
    %v1464 = vld [vmem:[#allocation14 + $0xa4] sm:$0xf]
    %v1465 = vld [vmem:[#allocation14 + $0xa8] sm:$0xf]
    %v1466 = vld [vmem:[#allocation14 + $0xac] sm:$0xf]
    %v1467 = vld [vmem:[#allocation14 + $0xb0] sm:$0xf]
    %v1468 = vld [vmem:[#allocation14 + $0xb4] sm:$0xf]
    %v1469 = vld [vmem:[#allocation14 + $0xb8] sm:$0xf]
    %v1470 = vld [vmem:[#allocation14 + $0xbc] sm:$0xf]
    %v1471 = vld [vmem:[%s10] sm:$0x1]
    %v1473 = vlaneseq
    %v1474 = vshrl.u32 %v1473, 7
    %v1475 = vsub.s32 0, %v1474
    %v1476 = vrot.slane %v1471, %v1475
    %v1526 = vunpack.c.l.b16 %v1423
    %v1527 = vunpack.c.l.b16 %v1424
    %v1528 = vunpack.c.l.b16 %v1425
    %v1529 = vunpack.c.l.b16 %v1426
    %v1530 = vunpack.c.l.b16 %v1427
    %v1531 = vunpack.c.l.b16 %v1428
    %v1532 = vunpack.c.l.b16 %v1429
    %v1533 = vunpack.c.l.b16 %v1430
    %v1534 = vunpack.c.l.b16 %v1431
    %v1535 = vunpack.c.l.b16 %v1432
    %v1536 = vunpack.c.l.b16 %v1433
    %v1537 = vunpack.c.l.b16 %v1434
    %v1538 = vunpack.c.l.b16 %v1435
    %v1539 = vunpack.c.l.b16 %v1436
    %v1540 = vunpack.c.l.b16 %v1437
    %v1541 = vunpack.c.l.b16 %v1438
    %v1542 = vunpack.c.l.b16 %v1439
    %v1543 = vunpack.c.l.b16 %v1440
    %v1544 = vunpack.c.l.b16 %v1441
    %v1545 = vunpack.c.l.b16 %v1442
    %v1546 = vunpack.c.l.b16 %v1443
    %v1547 = vunpack.c.l.b16 %v1444
    %v1548 = vunpack.c.l.b16 %v1445
    %v1549 = vunpack.c.l.b16 %v1446
    %v1550 = vunpack.c.l.b16 %v1447
    %v1551 = vunpack.c.l.b16 %v1448
    %v1552 = vunpack.c.l.b16 %v1449
    %v1553 = vunpack.c.l.b16 %v1450
    %v1554 = vunpack.c.l.b16 %v1451
    %v1555 = vunpack.c.l.b16 %v1452
    %v1556 = vunpack.c.l.b16 %v1453
    %v1557 = vunpack.c.l.b16 %v1454
    %v1558 = vunpack.c.l.b16 %v1455
    %v1559 = vunpack.c.l.b16 %v1456
    %v1560 = vunpack.c.l.b16 %v1457
    %v1561 = vunpack.c.l.b16 %v1458
    %v1562 = vunpack.c.l.b16 %v1459
    %v1563 = vunpack.c.l.b16 %v1460
    %v1564 = vunpack.c.l.b16 %v1461
    %v1565 = vunpack.c.l.b16 %v1462
    %v1566 = vunpack.c.l.b16 %v1463
    %v1567 = vunpack.c.l.b16 %v1464
    %v1568 = vunpack.c.l.b16 %v1465
    %v1569 = vunpack.c.l.b16 %v1466
    %v1570 = vunpack.c.l.b16 %v1467
    %v1571 = vunpack.c.l.b16 %v1468
    %v1572 = vunpack.c.l.b16 %v1469
    %v1573 = vunpack.c.l.b16 %v1470
    %v1574 = vpack.c.b16 %v1527, %v1526
    %v1575 = vpack.c.b16 %v1529, %v1528
    %v1576 = vpack.c.b16 %v1531, %v1530
    %v1577 = vpack.c.b16 %v1533, %v1532
    %v1578 = vpack.c.b16 %v1535, %v1534
    %v1579 = vpack.c.b16 %v1537, %v1536
    %v1580 = vpack.c.b16 %v1539, %v1538
    %v1581 = vpack.c.b16 %v1541, %v1540
    %v1582 = vpack.c.b16 %v1543, %v1542
    %v1583 = vpack.c.b16 %v1545, %v1544
    %v1584 = vpack.c.b16 %v1547, %v1546
    %v1585 = vpack.c.b16 %v1549, %v1548
    %v1586 = vpack.c.b16 %v1551, %v1550
    %v1587 = vpack.c.b16 %v1553, %v1552
    %v1588 = vpack.c.b16 %v1555, %v1554
    %v1589 = vpack.c.b16 %v1557, %v1556
    %v1590 = vpack.c.b16 %v1559, %v1558
    %v1591 = vpack.c.b16 %v1561, %v1560
    %v1592 = vpack.c.b16 %v1563, %v1562
    %v1593 = vpack.c.b16 %v1565, %v1564
    %v1594 = vpack.c.b16 %v1567, %v1566
    %v1595 = vpack.c.b16 %v1569, %v1568
    %v1596 = vpack.c.b16 %v1571, %v1570
    %v1597 = vpack.c.b16 %v1573, %v1572
    %1622 = vmatprep.subr.bf16.mxu0 0
    %1623 = vmatpush1.bf16.msra.mxu0 %v1574
    %1624 = vmatprep.subr.bf16.mxu0 0
    %1625 = vmatpush1.bf16.msra.mxu0 %v1575
    %1626 = vmatprep.subr.bf16.mxu0 0
    %1627 = vmatpush1.bf16.msra.mxu0 %v1576
    %1628 = vmatprep.subr.bf16.mxu0 0
    %1629 = vmatpush1.bf16.msra.mxu0 %v1577
    %1630 = vmatprep.subr.bf16.mxu0 0
    %1631 = vmatpush1.bf16.msra.mxu0 %v1578
    %1632 = vmatprep.subr.bf16.mxu0 0
    %1633 = vmatpush1.bf16.msra.mxu0 %v1579
    %1634 = vmatprep.subr.bf16.mxu0 0
    %1635 = vmatpush1.bf16.msra.mxu0 %v1580
    %1636 = vmatprep.subr.bf16.mxu0 0
    %1637 = vmatpush1.bf16.msra.mxu0 %v1581
    %1638 = vmatprep.subr.bf16.mxu0 0
    %1639 = vmatpush1.bf16.msra.mxu0 %v1582
    %1640 = vmatprep.subr.bf16.mxu0 0
    %1641 = vmatpush1.bf16.msra.mxu0 %v1583
    %1642 = vmatprep.subr.bf16.mxu0 0
    %1643 = vmatpush1.bf16.msra.mxu0 %v1584
    %1644 = vmatprep.subr.bf16.mxu0 0
    %1645 = vmatpush1.bf16.msra.mxu0 %v1585
    %1646 = vmatprep.subr.bf16.mxu0 0
    %1647 = vmatpush1.bf16.msra.mxu0 %v1586
    %1648 = vmatprep.subr.bf16.mxu0 0
    %1649 = vmatpush1.bf16.msra.mxu0 %v1587
    %1650 = vmatprep.subr.bf16.mxu0 0
    %1651 = vmatpush1.bf16.msra.mxu0 %v1588
    %1652 = vmatprep.subr.bf16.mxu0 0
    %1653 = vmatpush1.bf16.msra.mxu0 %v1589
    %1654 = vmatprep.mubr.bf16.mxu0 %v1418
    %1655 = vmatmul.mubr.bf16.gmra.mrb[0].mxu0 %v1417
    %v1656 = vpop.f32.mrb[0].mxu0
    %v1657 = vadd.f32 %v1476, %v1656
    %v1658 = vpop.f32.mrb[0].mxu0
    %v1659 = vpop.f32.mrb[0].mxu0
    %v1660 = vadd.f32 %v1476, %v1659
    %v1661 = vpop.f32.mrb[0].mxu0
    %1662 = vmatprep.mubr.bf16.mxu0 %v1421
    %1663 = vmatmul.mubr.bf16.gmra.mrb[0].mxu0 %v1420
    %v1664 = vpop.f32.mrb[0].mxu0
    %v1665 = vadd.f32 %v1476, %v1664
    %v1666 = vpop.f32.mrb[0].mxu0
    %v1667 = vpop.f32.mrb[0].mxu0
    %v1668 = vadd.f32 %v1476, %v1667
    %v1669 = vpop.f32.mrb[0].mxu0
    %1670 = vdwg.mxu0
    %1671 = vmatprep.subr.bf16.mxu0 0
    %1672 = vmatpush1.bf16.msra.mxu0 %v1590
    %1673 = vmatprep.subr.bf16.mxu0 0
    %1674 = vmatpush1.bf16.msra.mxu0 %v1591
    %1675 = vmatprep.subr.bf16.mxu0 0
    %1676 = vmatpush1.bf16.msra.mxu0 %v1592
    %1677 = vmatprep.subr.bf16.mxu0 0
    %1678 = vmatpush1.bf16.msra.mxu0 %v1593
    %1679 = vmatprep.subr.bf16.mxu0 0
    %1680 = vmatpush1.bf16.msra.mxu0 %v1594
    %1681 = vmatprep.subr.bf16.mxu0 0
    %1682 = vmatpush1.bf16.msra.mxu0 %v1595
    %1683 = vmatprep.subr.bf16.mxu0 0
    %1684 = vmatpush1.bf16.msra.mxu0 %v1596
    %1685 = vmatprep.subr.bf16.mxu0 0
    %1686 = vmatpush1.bf16.msra.mxu0 %v1597
    %1687 = vmatprep.subr.bf16.mxu0 0
    %1688 = vmatpush1.bf16.msra.mxu0 0
    %1689 = vmatprep.subr.bf16.mxu0 0
    %1690 = vmatpush1.bf16.msra.mxu0 0
    %1691 = vmatprep.subr.bf16.mxu0 0
    %1692 = vmatpush1.bf16.msra.mxu0 0
    %1693 = vmatprep.subr.bf16.mxu0 0
    %1694 = vmatpush1.bf16.msra.mxu0 0
    %1695 = vmatprep.subr.bf16.mxu0 0
    %1696 = vmatpush1.bf16.msra.mxu0 0
    %1697 = vmatprep.subr.bf16.mxu0 0
    %1698 = vmatpush1.bf16.msra.mxu0 0
    %1699 = vmatprep.subr.bf16.mxu0 0
    %1700 = vmatpush1.bf16.msra.mxu0 0
    %1701 = vmatprep.subr.bf16.mxu0 0
    %1702 = vmatpush1.bf16.msra.mxu0 0
    %1703 = vmatprep.mubr.bf16.mxu0 0
    %1704 = vmatmul.mubr.bf16.gmra.mrb[0].mxu0 %v1419
    %v1705 = vpop.f32.mrb[0].mxu0
    %v1706 = vadd.f32 %v1657, %v1705
    %v1707 = vpop.f32.mrb[0].mxu0
    %v1708 = vpop.f32.mrb[0].mxu0
    %v1709 = vadd.f32 %v1660, %v1708
    %v1710 = vpop.f32.mrb[0].mxu0
    %1711 = vmatprep.mubr.bf16.mxu0 0
    %1712 = vmatmul.mubr.bf16.gmra.mrb[0].mxu0 %v1422
    %v1713 = vpop.f32.mrb[0].mxu0
    %v1714 = vadd.f32 %v1665, %v1713
    %v1715 = vpop.f32.mrb[0].mxu0
    %v1716 = vpop.f32.mrb[0].mxu0
    %v1717 = vadd.f32 %v1668, %v1716
    %v1718 = vpop.f32.mrb[0].mxu0
    %1719 = vdwg.mxu0
    %v1720 = vmax.f32 %v1706, 0.0
    %v1721 = vmax.f32 %v1709, 0.0
    %v1722 = vmax.f32 %v1714, 0.0
    %v1723 = vmax.f32 %v1717, 0.0
    %v1724 = vld [vmem:[#allocation2 + $0x8] sm:$0xff]
    %v1725 = vld [vmem:[#allocation2 + $0x18] sm:$0xff]
    %v1726 = vunpack.c.l.bf16 %v1724
    %v1727 = vunpack.c.h.bf16 %v1724
    %v1728 = vunpack.c.l.bf16 %v1725
    %v1729 = vunpack.c.h.bf16 %v1725
    %v1730 = vadd.f32 %v1720, %v1726
    %v1731 = vadd.f32 %v1721, %v1727
    %v1732 = vadd.f32 %v1722, %v1728
    %v1733 = vadd.f32 %v1723, %v1729
    %v1734 = vmax.f32 %v1730, 0.0
    %v1735 = vmax.f32 %v1731, 0.0
    %v1736 = vmax.f32 %v1732, 0.0
    %v1737 = vmax.f32 %v1733, 0.0
    %v1738 = vpack.c.bf16 %v1735, %v1734
    %v1739 = vpack.c.bf16 %v1737, %v1736
    %1740 = vst [vmem:[#allocation2 + $0x8] sm:$0xff] %v1738
    %1741 = vst [vmem:[#allocation2 + $0x18] sm:$0xff] %v1739
    %v1742 = vld [vmem:[#allocation2 + $0x8] sm:$0x80]
    %v1743 = vld [vmem:[#allocation2 + $0x18] sm:$0x80]
    %v1744 = vld [vmem:[#allocation16] sm:$0xf]
    %v1745 = vld [vmem:[#allocation16 + $0x4] sm:$0xf]
    %v1746 = vld [vmem:[#allocation16 + $0x8] sm:$0xf]
    %v1747 = vld [vmem:[#allocation16 + $0xc] sm:$0xf]
    %v1748 = vld [vmem:[#allocation16 + $0x10] sm:$0xf]
    %v1749 = vld [vmem:[#allocation16 + $0x14] sm:$0xf]
    %v1750 = vld [vmem:[#allocation16 + $0x18] sm:$0xf]
    %v1751 = vld [vmem:[#allocation16 + $0x1c] sm:$0xf]
    %v1752 = vld [vmem:[#allocation16 + $0x20] sm:$0xf]
    %v1753 = vld [vmem:[#allocation16 + $0x24] sm:$0xf]
    %v1754 = vld [vmem:[#allocation16 + $0x28] sm:$0xf]
    %v1755 = vld [vmem:[#allocation16 + $0x2c] sm:$0xf]
    %v1756 = vld [vmem:[#allocation16 + $0x30] sm:$0xf]
    %v1757 = vld [vmem:[#allocation16 + $0x34] sm:$0xf]
    %v1758 = vld [vmem:[#allocation16 + $0x38] sm:$0xf]
    %v1759 = vld [vmem:[#allocation16 + $0x3c] sm:$0xf]
    %v1760 = vld [vmem:[%s12] sm:$0x1]
    %v1762 = vlaneseq
    %v1763 = vshrl.u32 %v1762, 7
    %v1764 = vsub.s32 0, %v1763
    %v1765 = vrot.slane %v1760, %v1764
    %v1769 = vunpack.c.h.b16 %v1742
    %v1770 = vunpack.c.h.b16 %v1743
    %v1771 = vrot.slane %v1769, 7
    %v1772 = vrot.slane %v1770, 6
    %vm1773 = vcmask 1041409
    %v1774 = vsel %vm1773, %v1772, %v1771
    %v1775 = vpack.c.b16 %v1774, %v1774
    %v1793 = vunpack.c.l.b16 %v1744
    %v1794 = vunpack.c.l.b16 %v1745
    %v1795 = vunpack.c.l.b16 %v1746
    %v1796 = vunpack.c.l.b16 %v1747
    %v1797 = vunpack.c.l.b16 %v1748
    %v1798 = vunpack.c.l.b16 %v1749
    %v1799 = vunpack.c.l.b16 %v1750
    %v1800 = vunpack.c.l.b16 %v1751
    %v1801 = vunpack.c.l.b16 %v1752
    %v1802 = vunpack.c.l.b16 %v1753
    %v1803 = vunpack.c.l.b16 %v1754
    %v1804 = vunpack.c.l.b16 %v1755
    %v1805 = vunpack.c.l.b16 %v1756
    %v1806 = vunpack.c.l.b16 %v1757
    %v1807 = vunpack.c.l.b16 %v1758
    %v1808 = vunpack.c.l.b16 %v1759
    %v1809 = vpack.c.b16 %v1794, %v1793
    %v1810 = vpack.c.b16 %v1796, %v1795
    %v1811 = vpack.c.b16 %v1798, %v1797
    %v1812 = vpack.c.b16 %v1800, %v1799
    %v1813 = vpack.c.b16 %v1802, %v1801
    %v1814 = vpack.c.b16 %v1804, %v1803
    %v1815 = vpack.c.b16 %v1806, %v1805
    %v1816 = vpack.c.b16 %v1808, %v1807
    %1825 = vmatprep.subr.bf16.mxu0 0
    %1826 = vmatpush1.bf16.msra.mxu0 %v1809
    %1827 = vmatprep.subr.bf16.mxu0 0
    %1828 = vmatpush1.bf16.msra.mxu0 %v1810
    %1829 = vmatprep.subr.bf16.mxu0 0
    %1830 = vmatpush1.bf16.msra.mxu0 %v1811
    %1831 = vmatprep.subr.bf16.mxu0 0
    %1832 = vmatpush1.bf16.msra.mxu0 %v1812
    %1833 = vmatprep.subr.bf16.mxu0 0
    %1834 = vmatpush1.bf16.msra.mxu0 %v1813
    %1835 = vmatprep.subr.bf16.mxu0 0
    %1836 = vmatpush1.bf16.msra.mxu0 %v1814
    %1837 = vmatprep.subr.bf16.mxu0 0
    %1838 = vmatpush1.bf16.msra.mxu0 %v1815
    %1839 = vmatprep.subr.bf16.mxu0 0
    %1840 = vmatpush1.bf16.msra.mxu0 %v1816
    %1841 = vmatprep.subr.bf16.mxu0 0
    %1842 = vmatpush1.bf16.msra.mxu0 0
    %1843 = vmatprep.subr.bf16.mxu0 0
    %1844 = vmatpush1.bf16.msra.mxu0 0
    %1845 = vmatprep.subr.bf16.mxu0 0
    %1846 = vmatpush1.bf16.msra.mxu0 0
    %1847 = vmatprep.subr.bf16.mxu0 0
    %1848 = vmatpush1.bf16.msra.mxu0 0
    %1849 = vmatprep.subr.bf16.mxu0 0
    %1850 = vmatpush1.bf16.msra.mxu0 0
    %1851 = vmatprep.subr.bf16.mxu0 0
    %1852 = vmatpush1.bf16.msra.mxu0 0
    %1853 = vmatprep.subr.bf16.mxu0 0
    %1854 = vmatpush1.bf16.msra.mxu0 0
    %1855 = vmatprep.subr.bf16.mxu0 0
    %1856 = vmatpush1.bf16.msra.mxu0 0
    %1857 = vmatprep.mubr.bf16.mxu0 0
    %1858 = vmatmul.mubr.bf16.gmra.mrb[0].mxu0 %v1775
    %v1859 = vpop.f32.mrb[0].mxu0
    %v1860 = vadd.f32 %v1765, %v1859
    %v1861 = vpop.f32.mrb[0].mxu0
    %v1862 = vpop.f32.mrb[0].mxu0
    %v1863 = vpop.f32.mrb[0].mxu0
    %1864 = vdwg.mxu0
    %v1865 = vlaneseq
    %v1866 = vand.u32 %v1865, 127
    %vm1867 = vcmp.lt.s32.totalorder %v1866, 10
    %v1868 = vsel %vm1867, %v1860, -inf
    %vm1869 = vcmask 1041408
    %v1870 = vsel %vm1869, %v1868, -inf
    %1871 = vmax.xlane.f32.xlu0 %v1870
    %v1872 = vpop.xlane.xlu0 %1871
    %v1873 = vsub.f32 %v1868, %v1872
    %v1874 = vmul.f32 %v1873, 1.442695
    %v1875 = vpow.pop %v1874
    %v1876 = vsel %vm1869, %v1875, 0.0
    %1877 = vadd.xlane.f32.xlu0 %v1876
    %v1878 = vpop.xlane.xlu0 %1877
    %v1879 = vlog2.pop %v1878
    %v1880 = vmul.f32 %v1879, 0.6931472
    %v1881 = vadd.f32 %v1872, %v1880
    %v1882 = vsub.f32 %v1868, %v1881
    %1883 = vst [vmem:[#allocation17] sm:$0x3] %v1882
    // Predicated region
    $region82: #{tpu_custom_call.1} parent=1 // pred_check
      _
    $region83: #{tpu_custom_call.1} parent=1 // pred_check_branch
      %1885 = sbr.rel (0) target = $region85
    $region84: #{tpu_custom_call.1} parent=1 // pred_region
      %s1887 = ssub.s32 32, 32
      %1888 = vsyncadd [#allocation7], %s1887
      %s1890 = sshll.u32 [#allocation17], 4
      %s1891 = int_to_ptr.vmem [resolvable:$true] %s1890
      %1893 = dma.vmem_to_hbm [thread:$0]  %s1891, 32, %s13, [#allocation7]
    $region85: #{tpu_custom_call.1} parent=1 // pred_fallthru
      _
    // Predicated region
    $region86: #{tpu_custom_call.1} parent=1 // pred_check
      _
    $region87: #{tpu_custom_call.1} parent=1 // pred_check_branch
      %1895 = sbr.rel (0) target = $region89
    $region88: #{tpu_custom_call.1} parent=1 // pred_region
      %1896 = dma.done [#allocation7], 32
    $region89: #{tpu_custom_call.1} parent=1 // pred_fallthru
      _
    %1897 = vsyncpa [#allocation6], 1
    %1898 = vsyncpa [#allocation9], 1
    %1899 = vsyncpa [#allocation12], 1
    %1900 = vsyncpa [#allocation15], 1
    %1901 = vsyncpa [#allocation7], 1

</llo_original>
